<compile_context>
chip_gen: v6e
topology: v6e:2x2x1
jax: 0.10.0
libtpu: 0.0.40
codegen_flags: <defaults>
</compile_context>

<pallas_src>
import jax
import jax.numpy as jnp
import numpy as np
from jax.experimental import pallas as pl
from jax.experimental.pallas import tpu as pltpu

SEG = 128  # lane-aligned segment width for packed gate groups / outputs


# ----------------------------------------------------------------------------
# Kernel: grid=(num_steps,), hidden carried in VMEM scratch, weights resident.
# ----------------------------------------------------------------------------
def fused_decode_kernel(emb_ref, h0_ref, enc_ref,
                        w_in_ref, w_ctx_ref, wo_h_ref, wa_e_ref, bias_ref,
                        out_ref, hid_scr, encp_scr):
    B, T, H = enc_ref.shape
    f32 = jnp.float32
    step = pl.program_id(0)

    enc = enc_ref[...]                               # (B, T, H), VMEM-resident across steps

    @pl.when(step == 0)
    def _():
        hid_scr[...] = h0_ref[...]
        # decode-invariant attention projection of encoder outputs, cached in scratch
        encp_scr[...] = jnp.dot(enc.reshape(B * T, H), wa_e_ref[...],
                                preferred_element_type=f32).reshape(B, T, SEG)

    emb = emb_ref[0]                                 # (B, E)  per-step embedding
    hid = hid_scr[...]                               # (B, H)  carried hidden state
    bias = bias_ref[...]                             # (3, 5*SEG) packed bias slab
    b_in = bias[0:1, :]                              # (1, 5*SEG)
    b_ctx = bias[1:2, :4 * SEG]                      # (1, 4*SEG)
    v = bias[2:3, :SEG]                              # (1, SEG)  attention score vector

    # ---- fused [emb | hid] projection: one MXU matmul -> 5 lane-aligned segments ----
    # segments: [attn_proj | r(emb+hid) | z(emb+hid) | n_emb | n_hid]
    xin = jnp.concatenate([emb, hid], axis=1)                               # (B, E+H)
    g = jnp.dot(xin, w_in_ref[...], preferred_element_type=f32) + b_in     # (B, 5*SEG)
    hid_proj = g[:, 0:SEG]                           # Wa_h @ hid + b_attn (pad lanes = 0)

    # ---------------- attention (pad lanes of encp / hid_proj / v are all zero) -------
    energy = jnp.maximum(encp_scr[...] + hid_proj[:, None, :], 0.0)        # (B, T, SEG)
    scores = jnp.sum(energy * v, axis=-1)                                  # (B, T)
    m = jnp.max(scores, axis=1, keepdims=True)
    e = jnp.exp(scores - m)
    attn = e * pl.reciprocal(jnp.sum(e, axis=1, keepdims=True))            # exact 1/x (EUP)

    # context = attn_weights.bmm(encoder_outputs): batched MXU dot
    ctx = jnp.einsum('bqt,bth->bqh', attn[:, None, :], enc,
                     preferred_element_type=f32)[:, 0, :]                  # (B, H)

    # ---- ctx-side projection: [r | z | n | out] lane-aligned segments (b_out folded) --
    gc = jnp.dot(ctx, w_ctx_ref[...], preferred_element_type=f32) + b_ctx  # (B, 4*SEG)

    # ---------------- GRU cell (all slices start on 128-lane boundaries) --------------
    r = jax.nn.sigmoid(g[:, SEG:SEG + H] + gc[:, 0:H])
    z = jax.nn.sigmoid(g[:, 2 * SEG:2 * SEG + H] + gc[:, SEG:SEG + H])
    n = jnp.tanh(g[:, 3 * SEG:3 * SEG + H] + gc[:, 2 * SEG:2 * SEG + H]
                 + r * g[:, 4 * SEG:4 * SEG + H])
    h_new = (1.0 - z) * n + z * hid
    hid_scr[...] = h_new                             # carry to next step

    # ---------------- output projection + packed lane-dense output slab ---------------
    out128 = (jnp.dot(h_new, wo_h_ref[...], preferred_element_type=f32)
              + gc[:, 3 * SEG:4 * SEG])              # (B, SEG); cols O: are zero weights
    out_ref[0, :, 0:SEG] = out128                    # logits (cols 0:O valid)
    out_ref[0, :, SEG:SEG + H] = h_new               # new hidden state
    out_ref[0, :, 2 * SEG:2 * SEG + T] = attn        # attention weights
    # (remaining pad lanes of the slab are never read back by the wrapper)


# ----------------------------------------------------------------------------
# One-time parameter repacking (hoisted out of the decode loop entirely).
# ----------------------------------------------------------------------------
def prepare_params(params):
    f32 = jnp.float32
    H = params["w_hh"].shape[1]
    E = params["w_ih"].shape[1] - H
    O = params["w_out"].shape[0]

    w_attn = params["w_attn"].astype(f32)            # (H, 2H): [hidden | enc] columns
    wa_h, wa_e = w_attn[:, :H].T, w_attn[:, H:].T    # (H, H) each
    w_ih = params["w_ih"].astype(f32)                # (3H, E+H): [emb | ctx] columns
    w_hh = params["w_hh"].astype(f32)                # (3H, H)
    w_out = params["w_out"].astype(f32)              # (O, 2H): [h_new | ctx] columns

    padc = lambda x, w: jnp.pad(x, ((0, 0), (0, w - x.shape[1])))   # pad lanes
    padv = lambda x, w: jnp.pad(x.astype(f32), (0, w - x.shape[0]))
    ze = jnp.zeros((E, H), f32)
    zh = jnp.zeros((H, H), f32)

    # fused [emb | hid] projection -> 5 segments of width SEG
    seg_attn = jnp.concatenate([ze, wa_h], axis=0)                        # hid-only
    seg_r = jnp.concatenate([w_ih[:H, :E].T, w_hh[:H, :].T], axis=0)
    seg_z = jnp.concatenate([w_ih[H:2 * H, :E].T, w_hh[H:2 * H, :].T], axis=0)
    seg_ne = jnp.concatenate([w_ih[2 * H:, :E].T, zh], axis=0)            # emb-only
    seg_nh = jnp.concatenate([ze, w_hh[2 * H:, :].T], axis=0)             # hid-only
    w_in = jnp.concatenate(
        [padc(s, SEG) for s in (seg_attn, seg_r, seg_z, seg_ne, seg_nh)], axis=1)

    # ctx projection -> [r | z | n | out] segments (Wo_c folded in)
    w_ctx = jnp.concatenate(
        [padc(w_ih[:H, E:].T, SEG), padc(w_ih[H:2 * H, E:].T, SEG),
         padc(w_ih[2 * H:, E:].T, SEG), padc(w_out[:, H:].T, SEG)], axis=1)

    wo_h = padc(w_out[:, :H].T, SEG)                 # (H, SEG)
    wa_e_p = padc(wa_e, SEG)                         # (H, SEG)

    b_ih, b_hh = params["b_ih"].astype(f32), params["b_hh"].astype(f32)
    b_in = jnp.concatenate([
        padv(params["b_attn"], SEG),
        padv(b_ih[:H] + b_hh[:H], SEG),
        padv(b_ih[H:2 * H] + b_hh[H:2 * H], SEG),
        padv(b_ih[2 * H:], SEG),
        padv(b_hh[2 * H:], SEG)])                    # (5*SEG,)
    b_ctx = jnp.concatenate([jnp.zeros((3 * SEG,), f32), padv(params["b_out"], SEG)])
    W = 5 * SEG
    bias = jnp.stack([b_in, padv(b_ctx, W), padv(params["v"], W)], axis=0)  # (3, 5*SEG)

    return {"w_in": w_in, "w_ctx": w_ctx, "wo_h": wo_h, "wa_e": wa_e_p, "bias": bias}


# ----------------------------------------------------------------------------
# Fused decode loop (num_steps == 1 reproduces the module forward exactly).
# ----------------------------------------------------------------------------
def decode_fused(prep, embedded_seq, h0, enc):
    """embedded_seq: (S,B,E), h0: (B,H), enc: (B,T,H) batch-major encoder outputs.
    Returns the packed (S, B, 3*SEG) output slab."""
    S, B, E = embedded_seq.shape
    _, T, H = enc.shape
    c2 = lambda s: (0, 0)
    c3 = lambda s: (0, 0, 0)

    return pl.pallas_call(
        fused_decode_kernel,
        out_shape=jax.ShapeDtypeStruct((S, B, 3 * SEG), jnp.float32),
        grid_spec=pltpu.PrefetchScalarGridSpec(
            num_scalar_prefetch=0,
            grid=(S,),
            in_specs=[
                pl.BlockSpec((1, B, E), lambda s: (s, 0, 0)),   # per-step embedding
                pl.BlockSpec((B, H), c2),                        # h0 (read once)
                pl.BlockSpec((B, T, H), c3),                     # encoder outputs (resident)
                pl.BlockSpec((E + H, 5 * SEG), c2),              # fused [emb|hid] weights
                pl.BlockSpec((H, 4 * SEG), c2),                  # ctx-side weights (+Wo_c)
                pl.BlockSpec((H, SEG), c2),                      # output proj (hidden part)
                pl.BlockSpec((H, SEG), c2),                      # attention enc projection
                pl.BlockSpec((3, 5 * SEG), c2),                  # packed bias / v slab
            ],
            out_specs=pl.BlockSpec((1, B, 3 * SEG), lambda s: (s, 0, 0)),
            scratch_shapes=[pltpu.VMEM((B, H), jnp.float32),        # hidden-state carry
                            pltpu.VMEM((B, T, SEG), jnp.float32)],  # cached enc @ Wa_e
        ),
        compiler_params=pltpu.CompilerParams(
            dimension_semantics=("arbitrary",)),    # steps carry state -> sequential
    )(embedded_seq, h0, enc,
      prep["w_in"], prep["w_ctx"], prep["wo_h"], prep["wa_e"], prep["bias"])


def unpack_slab(slab, O, H, T):
    out = slab[:, :, 0:O]                            # (S, B, O)
    hids = slab[:, :, SEG:SEG + H]                   # (S, B, H)
    attn = slab[:, :, 2 * SEG:2 * SEG + T]           # (S, B, T)
    return out, hids, attn


# ----------------------------------------------------------------------------
# Pure-JAX reference reproducing the PyTorch module semantics.
# ----------------------------------------------------------------------------
def reference_forward(params, embedded, last_hidden, encoder_outputs):
    _, B, E = embedded.shape
    T, _, H = encoder_outputs.shape
    hid = last_hidden[-1]                                   # (B, H)
    enc = jnp.transpose(encoder_outputs, (1, 0, 2))         # (B, T, H)

    h_rep = jnp.broadcast_to(hid[:, None, :], (B, T, H))
    cat = jnp.concatenate([h_rep, enc], axis=2)             # (B, T, 2H)
    energy = jax.nn.relu(cat @ params["w_attn"].T + params["b_attn"])
    scores = jnp.einsum("bth,h->bt", energy, params["v"])
    attn = jax.nn.softmax(scores, axis=1)                   # (B, T)
    ctx = jnp.einsum("bt,bth->bh", attn, enc)               # (B, H)

    x = jnp.concatenate([embedded[0], ctx], axis=1)         # (B, E+H)
    gi = x @ params["w_ih"].T + params["b_ih"]
    gh = hid @ params["w_hh"].T + params["b_hh"]
    r = jax.nn.sigmoid(gi[:, :H] + gh[:, :H])
    z = jax.nn.sigmoid(gi[:, H:2 * H] + gh[:, H:2 * H])
    n = jnp.tanh(gi[:, 2 * H:] + r * gh[:, 2 * H:])
    h_new = (1.0 - z) * n + z * hid

    out = jnp.concatenate([h_new, ctx], axis=1) @ params["w_out"].T + params["b_out"]
    return out, h_new[None], attn[:, None, :]


def init_params(key, output_size, embed_size, hidden_size):
    H, E, O = hidden_size, embed_size, output_size
    ks = jax.random.split(key, 10)
    u = lambda k, shape, s: jax.random.uniform(k, shape, jnp.float32, -s, s)
    return {
        "w_attn": u(ks[0], (H, 2 * H), 1.0 / np.sqrt(2 * H)),
        "b_attn": u(ks[1], (H,), 1.0 / np.sqrt(2 * H)),
        "v":      u(ks[2], (H,), 1.0 / np.sqrt(H)),
        "w_ih":   u(ks[3], (3 * H, E + H), 1.0 / np.sqrt(H)),
        "w_hh":   u(ks[4], (3 * H, H), 1.0 / np.sqrt(H)),
        "b_ih":   u(ks[5], (3 * H,), 1.0 / np.sqrt(H)),
        "b_hh":   u(ks[6], (3 * H,), 1.0 / np.sqrt(H)),
        "w_out":  u(ks[7], (O, 2 * H), 1.0 / np.sqrt(2 * H)),
        "b_out":  u(ks[8], (O,), 1.0 / np.sqrt(2 * H)),
    }


if __name__ == "__main__":
    B, T, E, H, O = 2, 8, 32, 32, 16       # batch, enc timesteps, embed, hidden, vocab
    S = 4                                  # steps for the fused-decode-loop check

    key = jax.random.PRNGKey(0)
    kp, k1, k2, k3, k4 = jax.random.split(key, 5)
    params = init_params(kp, O, E, H)

    embedded = jax.random.normal(k1, (1, B, E), jnp.float32)      # one decode step
    last_hidden = jax.random.normal(k2, (1, B, H), jnp.float32)   # n_layers = 1
    encoder_outputs = jax.random.normal(k3, (T, B, H), jnp.float32)

    prep = prepare_params(params)                                 # one-time repack
    enc_bmajor = jnp.transpose(encoder_outputs, (1, 0, 2))        # (B, T, H)
    run = jax.jit(decode_fused)

    # ---- single-step call: exact Seq2SeqDecoder.forward semantics -----------------
    slab = jax.block_until_ready(run(prep, embedded, last_hidden[-1], enc_bmajor))
    out_s, hid_s, attn_s = unpack_slab(slab, O, H, T)
    out, hidden, attn_w = out_s[0], hid_s[-1][None], attn_s[0][:, None, :]

    ref_out, ref_hidden, ref_attn = reference_forward(
        params, embedded, last_hidden, encoder_outputs)

    # default (multi-pass) MXU precision vs. XLA reference: tolerances set accordingly
    np.testing.assert_allclose(np.asarray(out), np.asarray(ref_out), rtol=1e-4, atol=1e-4)
    np.testing.assert_allclose(np.asarray(hidden), np.asarray(ref_hidden), rtol=1e-4, atol=1e-4)
    np.testing.assert_allclose(np.asarray(attn_w), np.asarray(ref_attn), rtol=1e-4, atol=1e-4)

    # ---- fused multi-step (teacher-forced) decode: one pallas_call, grid over steps --
    embedded_seq = jax.random.normal(k4, (S, B, E), jnp.float32)
    slab_seq = jax.block_until_ready(run(prep, embedded_seq, last_hidden[-1], enc_bmajor))
    outs, hids, attns = unpack_slab(slab_seq, O, H, T)

    hid_ref = last_hidden
    for s in range(S):
        r_out, hid_ref, r_attn = reference_forward(
            params, embedded_seq[s:s + 1], hid_ref, encoder_outputs)
        np.testing.assert_allclose(np.asarray(outs[s]), np.asarray(r_out),
                                   rtol=1e-4, atol=1e-4)
        np.testing.assert_allclose(np.asarray(hids[s]), np.asarray(hid_ref[0]),
                                   rtol=1e-4, atol=1e-4)
        np.testing.assert_allclose(np.asarray(attns[s]), np.asarray(r_attn[:, 0, :]),
                                   rtol=1e-4, atol=1e-4)

    print("KERNEL_OK")
</pallas_src>

<mosaic_0001>
module attributes {stable_mosaic.version = 11 : i64} {
  func.func @fused_decode_kernel(%arg0: i32, %arg1: memref<1x2x32xf32, #tpu.memory_space<vmem>>, %arg2: memref<2x32xf32, #tpu.memory_space<vmem>>, %arg3: memref<2x8x32xf32, #tpu.memory_space<vmem>>, %arg4: memref<64x640xf32, #tpu.memory_space<vmem>>, %arg5: memref<32x512xf32, #tpu.memory_space<vmem>>, %arg6: memref<32x128xf32, #tpu.memory_space<vmem>>, %arg7: memref<32x128xf32, #tpu.memory_space<vmem>>, %arg8: memref<3x640xf32, #tpu.memory_space<vmem>>, %arg9: memref<1x2x384xf32, #tpu.memory_space<vmem>>, %arg10: memref<2x32xf32, #tpu.memory_space<vmem>>, %arg11: memref<2x8x128xf32, #tpu.memory_space<vmem>>) attributes {dimension_semantics = [#tpu.dimension_semantics<arbitrary>], iteration_bounds = array<i64: 1>, scalar_prefetch = 0 : i64, scratch_operands = 2 : i64, tpu.core_type = #tpu.core_type<tc>, window_params = [{transform_indices = @transform_0, window_bounds = array<i64: 1, 2, 32>}, {pipeline_mode = #tpu.pipeline_mode<synchronous>, transform_indices = @transform_1, window_bounds = array<i64: 2, 32>}, {pipeline_mode = #tpu.pipeline_mode<synchronous>, transform_indices = @transform_2, window_bounds = array<i64: 2, 8, 32>}, {pipeline_mode = #tpu.pipeline_mode<synchronous>, transform_indices = @transform_3, window_bounds = array<i64: 64, 640>}, {pipeline_mode = #tpu.pipeline_mode<synchronous>, transform_indices = @transform_4, window_bounds = array<i64: 32, 512>}, {pipeline_mode = #tpu.pipeline_mode<synchronous>, transform_indices = @transform_5, window_bounds = array<i64: 32, 128>}, {pipeline_mode = #tpu.pipeline_mode<synchronous>, transform_indices = @transform_6, window_bounds = array<i64: 32, 128>}, {pipeline_mode = #tpu.pipeline_mode<synchronous>, transform_indices = @transform_7, window_bounds = array<i64: 3, 640>}, {transform_indices = @transform_8, window_bounds = array<i64: 1, 2, 384>}]} {
    %c0 = arith.constant 0 : index
    %c0_0 = arith.constant 0 : index
    %c0_1 = arith.constant 0 : index
    %0 = vector.load %arg3[%c0, %c0_0, %c0_1] : memref<2x8x32xf32, #tpu.memory_space<vmem>>, vector<2x8x32xf32>
    %c0_i32 = arith.constant 0 : i32
    %1 = arith.cmpi eq, %arg0, %c0_i32 : i32
    %2 = arith.extui %1 : i1 to i32
    %c0_i32_2 = arith.constant 0 : i32
    %3 = arith.cmpi ne, %2, %c0_i32_2 : i32
    scf.if %3 {
      %c0_38 = arith.constant 0 : index
      %c0_39 = arith.constant 0 : index
      %86 = vector.load %arg2[%c0_38, %c0_39] : memref<2x32xf32, #tpu.memory_space<vmem>>, vector<2x32xf32>
      %c0_40 = arith.constant 0 : index
      %c0_41 = arith.constant 0 : index
      %87 = vector.load %arg10[%c0_40, %c0_41] : memref<2x32xf32, #tpu.memory_space<vmem>>, vector<2x32xf32>
      tpu.vector_store %arg10[%c0_40, %c0_41], %86 {strides = array<i32>} : memref<2x32xf32, #tpu.memory_space<vmem>>, vector<2x32xf32>,
      %88 = vector.shape_cast %0 : vector<2x8x32xf32> to vector<16x32xf32>
      %c0_42 = arith.constant 0 : index
      %c0_43 = arith.constant 0 : index
      %89 = vector.load %arg7[%c0_42, %c0_43] : memref<32x128xf32, #tpu.memory_space<vmem>>, vector<32x128xf32>
      %cst_44 = arith.constant dense<0.000000e+00> : vector<16x128xf32>
      %90 = tpu.matmul %88, %89, %cst_44 {dimension_numbers = #tpu.dot_dimension_numbers<[1], [0], [0], [1], [0, 0, 1, 1], [], []>} : vector<16x32xf32>, vector<32x128xf32>, vector<16x128xf32> -> vector<16x128xf32>
      %91 = vector.shape_cast %90 : vector<16x128xf32> to vector<2x8x128xf32>
      %c0_45 = arith.constant 0 : index
      %c0_46 = arith.constant 0 : index
      %c0_47 = arith.constant 0 : index
      %92 = vector.load %arg11[%c0_45, %c0_46, %c0_47] : memref<2x8x128xf32, #tpu.memory_space<vmem>>, vector<2x8x128xf32>
      tpu.vector_store %arg11[%c0_45, %c0_46, %c0_47], %91 {strides = array<i32>} : memref<2x8x128xf32, #tpu.memory_space<vmem>>, vector<2x8x128xf32>,
    } else {
    }
    %c0_3 = arith.constant 0 : index
    %c0_4 = arith.constant 0 : index
    %c0_5 = arith.constant 0 : index
    %4 = vector.load %arg1[%c0_3, %c0_4, %c0_5] : memref<1x2x32xf32, #tpu.memory_space<vmem>>, vector<1x2x32xf32>
    %5 = vector.shape_cast %4 : vector<1x2x32xf32> to vector<2x32xf32>
    %c0_6 = arith.constant 0 : index
    %c0_7 = arith.constant 0 : index
    %6 = vector.load %arg10[%c0_6, %c0_7] : memref<2x32xf32, #tpu.memory_space<vmem>>, vector<2x32xf32>
    %c0_8 = arith.constant 0 : index
    %c0_9 = arith.constant 0 : index
    %7 = vector.load %arg8[%c0_8, %c0_9] : memref<3x640xf32, #tpu.memory_space<vmem>>, vector<3x640xf32>
    %8 = vector.extract_strided_slice %7 {offsets = [0, 0], sizes = [1, 640], strides = [1, 1]} : vector<3x640xf32> to vector<1x640xf32>
    %9 = vector.extract_strided_slice %7 {offsets = [1, 0], sizes = [1, 512], strides = [1, 1]} : vector<3x640xf32> to vector<1x512xf32>
    %10 = vector.extract_strided_slice %7 {offsets = [2, 0], sizes = [1, 128], strides = [1, 1]} : vector<3x640xf32> to vector<1x128xf32>
    %11 = tpu.concatenate %5, %6 in 1 : vector<2x32xf32>, vector<2x32xf32> -> vector<2x64xf32>
    %c0_10 = arith.constant 0 : index
    %c0_11 = arith.constant 0 : index
    %12 = vector.load %arg4[%c0_10, %c0_11] : memref<64x640xf32, #tpu.memory_space<vmem>>, vector<64x640xf32>
    %cst = arith.constant dense<0.000000e+00> : vector<2x640xf32>
    %13 = tpu.matmul %11, %12, %cst {dimension_numbers = #tpu.dot_dimension_numbers<[1], [0], [0], [1], [0, 0, 1, 1], [], []>} : vector<2x64xf32>, vector<64x640xf32>, vector<2x640xf32> -> vector<2x640xf32>
    %14 = vector.broadcast %8 : vector<1x640xf32> to vector<2x640xf32>
    %15 = arith.addf %13, %14 : vector<2x640xf32>
    %16 = vector.extract_strided_slice %15 {offsets = [0, 0], sizes = [2, 128], strides = [1, 1]} : vector<2x640xf32> to vector<2x128xf32>
    %c0_12 = arith.constant 0 : index
    %c0_13 = arith.constant 0 : index
    %c0_14 = arith.constant 0 : index
    %17 = vector.load %arg11[%c0_12, %c0_13, %c0_14] : memref<2x8x128xf32, #tpu.memory_space<vmem>>, vector<2x8x128xf32>
    %18 = vector.shape_cast %16 : vector<2x128xf32> to vector<2x1x128xf32>
    %19 = vector.broadcast %18 : vector<2x1x128xf32> to vector<2x8x128xf32>
    %20 = arith.addf %17, %19 : vector<2x8x128xf32>
    %cst_15 = arith.constant 0.000000e+00 : f32
    %21 = vector.broadcast %cst_15 : f32 to vector<2x8x128xf32>
    %22 = arith.maximumf %20, %21 : vector<2x8x128xf32>
    %23 = vector.shape_cast %10 : vector<1x128xf32> to vector<1x1x128xf32>
    %24 = vector.broadcast %23 : vector<1x1x128xf32> to vector<2x8x128xf32>
    %25 = arith.mulf %22, %24 : vector<2x8x128xf32>
    %cst_16 = arith.constant dense<0.000000e+00> : vector<2x8xf32>
    %26 = vector.multi_reduction <add>, %25, %cst_16 [2] : vector<2x8x128xf32> to vector<2x8xf32>
    %cst_17 = arith.constant dense<0xFF800000> : vector<2xf32>
    %27 = vector.multi_reduction <maximumf>, %26, %cst_17 [1] : vector<2x8xf32> to vector<2xf32>
    %28 = vector.shape_cast %27 : vector<2xf32> to vector<2x1xf32>
    %29 = vector.broadcast %28 : vector<2x1xf32> to vector<2x8xf32>
    %30 = arith.subf %26, %29 : vector<2x8xf32>
    %31 = math.exp %30 : vector<2x8xf32>
    %cst_18 = arith.constant dense<0.000000e+00> : vector<2xf32>
    %32 = vector.multi_reduction <add>, %31, %cst_18 [1] : vector<2x8xf32> to vector<2xf32>
    %33 = vector.shape_cast %32 : vector<2xf32> to vector<2x1xf32>
    %34 = tpu.reciprocal %33 : vector<2x1xf32> -> vector<2x1xf32>
    %35 = vector.broadcast %34 : vector<2x1xf32> to vector<2x8xf32>
    %36 = arith.mulf %31, %35 : vector<2x8xf32>
    %37 = vector.shape_cast %36 : vector<2x8xf32> to vector<2x1x8xf32>
    "tpu.trace_start"() <{level = 10 : i32, message = "bqt,bth->bqh"}> : () -> ()
    %cst_19 = arith.constant dense<0.000000e+00> : vector<2x1x32xf32>
    %38 = tpu.matmul %37, %0, %cst_19 {dimension_numbers = #tpu.dot_dimension_numbers<[2], [1], [1], [2], [0, 0, 0, 1, 1, 2], [0], [0]>} : vector<2x1x8xf32>, vector<2x8x32xf32>, vector<2x1x32xf32> -> vector<2x1x32xf32>
    "tpu.trace_stop"() : () -> ()
    %39 = vector.shape_cast %38 : vector<2x1x32xf32> to vector<2x32xf32>
    %c0_20 = arith.constant 0 : index
    %c0_21 = arith.constant 0 : index
    %40 = vector.load %arg5[%c0_20, %c0_21] : memref<32x512xf32, #tpu.memory_space<vmem>>, vector<32x512xf32>
    %cst_22 = arith.constant dense<0.000000e+00> : vector<2x512xf32>
    %41 = tpu.matmul %39, %40, %cst_22 {dimension_numbers = #tpu.dot_dimension_numbers<[1], [0], [0], [1], [0, 0, 1, 1], [], []>} : vector<2x32xf32>, vector<32x512xf32>, vector<2x512xf32> -> vector<2x512xf32>
    %42 = vector.broadcast %9 : vector<1x512xf32> to vector<2x512xf32>
    %43 = arith.addf %41, %42 : vector<2x512xf32>
    %44 = vector.extract_strided_slice %15 {offsets = [0, 128], sizes = [2, 32], strides = [1, 1]} : vector<2x640xf32> to vector<2x32xf32>
    %45 = vector.extract_strided_slice %43 {offsets = [0, 0], sizes = [2, 32], strides = [1, 1]} : vector<2x512xf32> to vector<2x32xf32>
    %46 = arith.addf %44, %45 : vector<2x32xf32>
    %47 = arith.negf %46 : vector<2x32xf32>
    %48 = math.exp %47 : vector<2x32xf32>
    %cst_23 = arith.constant 1.000000e+00 : f32
    %49 = vector.broadcast %cst_23 : f32 to vector<2x32xf32>
    %50 = arith.addf %49, %48 : vector<2x32xf32>
    %51 = arith.divf %49, %50 : vector<2x32xf32>
    %52 = vector.extract_strided_slice %15 {offsets = [0, 256], sizes = [2, 32], strides = [1, 1]} : vector<2x640xf32> to vector<2x32xf32>
    %53 = vector.extract_strided_slice %43 {offsets = [0, 128], sizes = [2, 32], strides = [1, 1]} : vector<2x512xf32> to vector<2x32xf32>
    %54 = arith.addf %52, %53 : vector<2x32xf32>
    %55 = arith.negf %54 : vector<2x32xf32>
    %56 = math.exp %55 : vector<2x32xf32>
    %cst_24 = arith.constant 1.000000e+00 : f32
    %57 = vector.broadcast %cst_24 : f32 to vector<2x32xf32>
    %58 = arith.addf %57, %56 : vector<2x32xf32>
    %59 = arith.divf %57, %58 : vector<2x32xf32>
    %60 = vector.extract_strided_slice %15 {offsets = [0, 384], sizes = [2, 32], strides = [1, 1]} : vector<2x640xf32> to vector<2x32xf32>
    %61 = vector.extract_strided_slice %43 {offsets = [0, 256], sizes = [2, 32], strides = [1, 1]} : vector<2x512xf32> to vector<2x32xf32>
    %62 = arith.addf %60, %61 : vector<2x32xf32>
    %63 = vector.extract_strided_slice %15 {offsets = [0, 512], sizes = [2, 32], strides = [1, 1]} : vector<2x640xf32> to vector<2x32xf32>
    %64 = arith.mulf %51, %63 : vector<2x32xf32>
    %65 = arith.addf %62, %64 : vector<2x32xf32>
    %66 = math.tanh %65 : vector<2x32xf32>
    %cst_25 = arith.constant 1.000000e+00 : f32
    %67 = vector.broadcast %cst_25 : f32 to vector<2x32xf32>
    %68 = arith.subf %67, %59 : vector<2x32xf32>
    %69 = arith.mulf %68, %66 : vector<2x32xf32>
    %70 = arith.mulf %59, %6 : vector<2x32xf32>
    %71 = arith.addf %69, %70 : vector<2x32xf32>
    %c0_26 = arith.constant 0 : index
    %c0_27 = arith.constant 0 : index
    %72 = vector.load %arg10[%c0_26, %c0_27] : memref<2x32xf32, #tpu.memory_space<vmem>>, vector<2x32xf32>
    tpu.vector_store %arg10[%c0_26, %c0_27], %71 {strides = array<i32>} : memref<2x32xf32, #tpu.memory_space<vmem>>, vector<2x32xf32>,
    %c0_28 = arith.constant 0 : index
    %c0_29 = arith.constant 0 : index
    %73 = vector.load %arg6[%c0_28, %c0_29] : memref<32x128xf32, #tpu.memory_space<vmem>>, vector<32x128xf32>
    %cst_30 = arith.constant dense<0.000000e+00> : vector<2x128xf32>
    %74 = tpu.matmul %71, %73, %cst_30 {dimension_numbers = #tpu.dot_dimension_numbers<[1], [0], [0], [1], [0, 0, 1, 1], [], []>} : vector<2x32xf32>, vector<32x128xf32>, vector<2x128xf32> -> vector<2x128xf32>
    %75 = vector.extract_strided_slice %43 {offsets = [0, 384], sizes = [2, 128], strides = [1, 1]} : vector<2x512xf32> to vector<2x128xf32>
    %76 = arith.addf %74, %75 : vector<2x128xf32>
    %c0_31 = arith.constant 0 : index
    %c0_32 = arith.constant 0 : index
    %c0_33 = arith.constant 0 : index
    %77 = vector.load %arg9[%c0_31, %c0_32, %c0_33] : memref<1x2x384xf32, #tpu.memory_space<vmem>>, vector<1x2x128xf32>
    %78 = vector.shape_cast %77 : vector<1x2x128xf32> to vector<2x128xf32>
    %79 = vector.shape_cast %76 : vector<2x128xf32> to vector<1x2x128xf32>
    tpu.vector_store %arg9[%c0_31, %c0_32, %c0_33], %79 {strides = array<i32>} : memref<1x2x384xf32, #tpu.memory_space<vmem>>, vector<1x2x128xf32>,
    %c0_34 = arith.constant 0 : index
    %c0_35 = arith.constant 0 : index
    %c128 = arith.constant 128 : index
    %80 = vector.load %arg9[%c0_34, %c0_35, %c128] : memref<1x2x384xf32, #tpu.memory_space<vmem>>, vector<1x2x32xf32>
    %81 = vector.shape_cast %80 : vector<1x2x32xf32> to vector<2x32xf32>
    %82 = vector.shape_cast %71 : vector<2x32xf32> to vector<1x2x32xf32>
    tpu.vector_store %arg9[%c0_34, %c0_35, %c128], %82 {strides = array<i32>} : memref<1x2x384xf32, #tpu.memory_space<vmem>>, vector<1x2x32xf32>,
    %c0_36 = arith.constant 0 : index
    %c0_37 = arith.constant 0 : index
    %c256 = arith.constant 256 : index
    %83 = vector.load %arg9[%c0_36, %c0_37, %c256] : memref<1x2x384xf32, #tpu.memory_space<vmem>>, vector<1x2x8xf32>
    %84 = vector.shape_cast %83 : vector<1x2x8xf32> to vector<2x8xf32>
    %85 = vector.shape_cast %36 : vector<2x8xf32> to vector<1x2x8xf32>
    tpu.vector_store %arg9[%c0_36, %c0_37, %c256], %85 {strides = array<i32>} : memref<1x2x384xf32, #tpu.memory_space<vmem>>, vector<1x2x8xf32>,
    return
  }
  func.func @transform_0(%arg0: i32) -> (i32, i32, i32) {
    %c0_i32 = arith.constant 0 : i32
    %c0_i32_0 = arith.constant 0 : i32
    %c0_i32_1 = arith.constant 0 : i32
    return %arg0, %c0_i32, %c0_i32_0 : i32, i32, i32
  }
  func.func @transform_1(%arg0: i32) -> (i32, i32) {
    %c0_i32 = arith.constant 0 : i32
    %c0_i32_0 = arith.constant 0 : i32
    %c0_i32_1 = arith.constant 0 : i32
    return %c0_i32, %c0_i32_0 : i32, i32
  }
  func.func @transform_2(%arg0: i32) -> (i32, i32, i32) {
    %c0_i32 = arith.constant 0 : i32
    %c0_i32_0 = arith.constant 0 : i32
    %c0_i32_1 = arith.constant 0 : i32
    %c0_i32_2 = arith.constant 0 : i32
    return %c0_i32, %c0_i32_0, %c0_i32_1 : i32, i32, i32
  }
  func.func @transform_3(%arg0: i32) -> (i32, i32) {
    %c0_i32 = arith.constant 0 : i32
    %c0_i32_0 = arith.constant 0 : i32
    %c0_i32_1 = arith.constant 0 : i32
    return %c0_i32, %c0_i32_0 : i32, i32
  }
  func.func @transform_4(%arg0: i32) -> (i32, i32) {
    %c0_i32 = arith.constant 0 : i32
    %c0_i32_0 = arith.constant 0 : i32
    %c0_i32_1 = arith.constant 0 : i32
    return %c0_i32, %c0_i32_0 : i32, i32
  }
  func.func @transform_5(%arg0: i32) -> (i32, i32) {
    %c0_i32 = arith.constant 0 : i32
    %c0_i32_0 = arith.constant 0 : i32
    %c0_i32_1 = arith.constant 0 : i32
    return %c0_i32, %c0_i32_0 : i32, i32
  }
  func.func @transform_6(%arg0: i32) -> (i32, i32) {
    %c0_i32 = arith.constant 0 : i32
    %c0_i32_0 = arith.constant 0 : i32
    %c0_i32_1 = arith.constant 0 : i32
    return %c0_i32, %c0_i32_0 : i32, i32
  }
  func.func @transform_7(%arg0: i32) -> (i32, i32) {
    %c0_i32 = arith.constant 0 : i32
    %c0_i32_0 = arith.constant 0 : i32
    %c0_i32_1 = arith.constant 0 : i32
    return %c0_i32, %c0_i32_0 : i32, i32
  }
  func.func @transform_8(%arg0: i32) -> (i32, i32, i32) {
    %c0_i32 = arith.constant 0 : i32
    %c0_i32_0 = arith.constant 0 : i32
    %c0_i32_1 = arith.constant 0 : i32
    return %arg0, %c0_i32, %c0_i32_0 : i32, i32, i32
  }
}

</mosaic_0001>

<llo_original>
// kernel: decode_fused.1
$region0: #{decode_fused.1}
  #allocation0 [shape = 'u32[]', space=smem, size = 0x4, offset = 0x4, fixed_abs, tag = 'smem constant byte address 0x4 - core index']
  #allocation1 [shape = 'u32[144,128]{1,0:T(1,128)}', space=vmem, size = 0x12000, scoped, tag = 'internal scratch']
  #allocation2 [shape = 'f32[2,32]{1,0:T(2,128)}', space=vmem, size = 0x400, scoped, tag = 'scratch operand']
  #allocation3 [shape = 'f32[2,8,128]{2,1,0:T(8,128)}', space=vmem, size = 0x2000, scoped, tag = 'scratch operand']
  %s0 = inlined_call_operand.vmem [shape: f32[1,2,32], index: 0, kind: input, shape index: {}]
  %s1 = inlined_call_operand.vmem [shape: f32[2,32], index: 1, kind: input, shape index: {}]
  %s2 = inlined_call_operand.hbm [shape: f32[2,8,32], index: 2, kind: input, shape index: {}]
  %s3 = inlined_call_operand.hbm [shape: f32[64,640], index: 3, kind: input, shape index: {}]
  %s4 = inlined_call_operand.hbm [shape: f32[32,512], index: 4, kind: input, shape index: {}]
  %s5 = inlined_call_operand.hbm [shape: f32[32,128], index: 5, kind: input, shape index: {}]
  %s6 = inlined_call_operand.hbm [shape: f32[32,128], index: 6, kind: input, shape index: {}]
  %s7 = inlined_call_operand.hbm [shape: f32[3,640], index: 7, kind: input, shape index: {}]
  %s8 = inlined_call_operand.hbm [shape: f32[1,2,384], index: 8, kind: output, shape index: {}]
  %s9 = sld [smem:[#allocation0]]
  $region70: #{decode_fused.1} parent=0
    _
  %s11 = ssub.s32 1, %s9
  %s12 = scalar_select 0, %s11, %s9
  $region1: #{decode_fused.1} parent=0
    #allocation4 [shape = 'u8[8192]{0}', space=vmem, size = 0x2000, scoped, tag = 'input window, operand 2, single buffered']
    #allocation5 [shape = 's32[1]{0}', space=sflag, size = 0x4, scoped, tag = 'scoped memory for decode_fused.1']
    #allocation6 [shape = 's32[1]{0}', space=sflag, size = 0x4, scoped, tag = 'scoped memory for decode_fused.1']
    #allocation7 [shape = 'u8[163840]{0}', space=vmem, size = 0x28000, scoped, tag = 'input window, operand 3, single buffered']
    #allocation8 [shape = 's32[1]{0}', space=sflag, size = 0x4, scoped, tag = 'scoped memory for decode_fused.1']
    #allocation9 [shape = 'u8[65536]{0}', space=vmem, size = 0x10000, scoped, tag = 'input window, operand 4, single buffered']
    #allocation10 [shape = 'u8[16384]{0}', space=vmem, size = 0x4000, scoped, tag = 'input window, operand 5, single buffered']
    #allocation11 [shape = 's32[1]{0}', space=sflag, size = 0x4, scoped, tag = 'scoped memory for decode_fused.1']
    #allocation12 [shape = 'u8[16384]{0}', space=vmem, size = 0x4000, scoped, tag = 'input window, operand 6, single buffered']
    #allocation13 [shape = 'u8[10240]{0}', space=vmem, size = 0x2800, scoped, tag = 'input window, operand 7, single buffered']
    #allocation14 [shape = 's32[1]{0}', space=sflag, size = 0x4, scoped, tag = 'scoped memory for decode_fused.1']
    #allocation15 [shape = 'u8[3072]{0}', space=vmem, size = 0xc00, scoped, tag = 'output window, operand 0, single buffered']
    %13 = vsyncpa [#allocation5], 0
    %14 = vsyncpa [#allocation8], 0
    %15 = vsyncpa [#allocation11], 0
    %16 = vsyncpa [#allocation14], 0
    %17 = vsyncpa [#allocation6], 0
    // Predicated region
    $region2: #{decode_fused.1} parent=1 // pred_check
      _
    $region3: #{decode_fused.1} parent=1 // pred_check_branch
      %19 = sbr.rel (0) target = $region5
    $region4: #{decode_fused.1} parent=1 // pred_region
      _
    $region5: #{decode_fused.1} parent=1 // pred_fallthru
      _
    // Predicated region
    $region6: #{decode_fused.1} parent=1 // pred_check
      _
    $region7: #{decode_fused.1} parent=1 // pred_check_branch
      %21 = sbr.rel (0) target = $region9
    $region8: #{decode_fused.1} parent=1 // pred_region
      _
    $region9: #{decode_fused.1} parent=1 // pred_fallthru
      _
    // Predicated region
    $region10: #{decode_fused.1} parent=1 // pred_check
      _
    $region11: #{decode_fused.1} parent=1 // pred_check_branch
      %23 = sbr.rel (0) target = $region13
    $region12: #{decode_fused.1} parent=1 // pred_region
      %s25 = ssub.s32 256, 256
      %26 = vsyncadd [#allocation5], %s25
      %s27 = sshll.u32 [#allocation4], 4
      %s28 = int_to_ptr.vmem [resolvable:$true] %s27
      %33 = dma.hbm_to_vmem [thread:$0]  %s2, 256, %s28, [#allocation5], 128, 128, 8
    $region13: #{decode_fused.1} parent=1 // pred_fallthru
      _
    // Predicated region
    $region14: #{decode_fused.1} parent=1 // pred_check
      _
    $region15: #{decode_fused.1} parent=1 // pred_check_branch
      %35 = sbr.rel (0) target = $region17
    $region16: #{decode_fused.1} parent=1 // pred_region
      %s37 = ssub.s32 5120, 5120
      %38 = vsyncadd [#allocation8], %s37
      %s39 = sshll.u32 [#allocation7], 4
      %s40 = int_to_ptr.vmem [resolvable:$true] %s39
      %45 = dma.hbm_to_vmem [thread:$0]  %s3, 5120, %s40, [#allocation8], 640, 640, 40
    $region17: #{decode_fused.1} parent=1 // pred_fallthru
      _
    // Predicated region
    $region18: #{decode_fused.1} parent=1 // pred_check
      _
    $region19: #{decode_fused.1} parent=1 // pred_check_branch
      %47 = sbr.rel (0) target = $region21
    $region20: #{decode_fused.1} parent=1 // pred_region
      %s49 = ssub.s32 2048, 2048
      %50 = vsyncadd [#allocation8], %s49
      %s51 = sshll.u32 [#allocation9], 4
      %s52 = int_to_ptr.vmem [resolvable:$true] %s51
      %57 = dma.hbm_to_vmem [thread:$0]  %s4, 2048, %s52, [#allocation8], 512, 512, 32
    $region21: #{decode_fused.1} parent=1 // pred_fallthru
      _
    // Predicated region
    $region22: #{decode_fused.1} parent=1 // pred_check
      _
    $region23: #{decode_fused.1} parent=1 // pred_check_branch
      %59 = sbr.rel (0) target = $region25
    $region24: #{decode_fused.1} parent=1 // pred_region
      %s61 = ssub.s32 512, 512
      %62 = vsyncadd [#allocation11], %s61
      %s63 = sshll.u32 [#allocation10], 4
      %s64 = int_to_ptr.vmem [resolvable:$true] %s63
      %69 = dma.hbm_to_vmem [thread:$0]  %s5, 512, %s64, [#allocation11], 128, 128, 8
    $region25: #{decode_fused.1} parent=1 // pred_fallthru
      _
    // Predicated region
    $region26: #{decode_fused.1} parent=1 // pred_check
      _
    $region27: #{decode_fused.1} parent=1 // pred_check_branch
      %71 = sbr.rel (0) target = $region29
    $region28: #{decode_fused.1} parent=1 // pred_region
      %s73 = ssub.s32 512, 512
      %74 = vsyncadd [#allocation11], %s73
      %s75 = sshll.u32 [#allocation12], 4
      %s76 = int_to_ptr.vmem [resolvable:$true] %s75
      %81 = dma.hbm_to_vmem [thread:$0]  %s6, 512, %s76, [#allocation11], 128, 128, 8
    $region29: #{decode_fused.1} parent=1 // pred_fallthru
      _
    // Predicated region
    $region30: #{decode_fused.1} parent=1 // pred_check
      _
    $region31: #{decode_fused.1} parent=1 // pred_check_branch
      %83 = sbr.rel (0) target = $region33
    $region32: #{decode_fused.1} parent=1 // pred_region
      %s85 = ssub.s32 320, 320
      %86 = vsyncadd [#allocation14], %s85
      %s88 = sshll.u32 [#allocation13], 4
      %s89 = int_to_ptr.vmem [resolvable:$true] %s88
      %91 = dma.hbm_to_vmem [thread:$0]  %s7, 320, %s89, [#allocation14]
    $region33: #{decode_fused.1} parent=1 // pred_fallthru
      _
    // Predicated region
    $region34: #{decode_fused.1} parent=1 // pred_check
      _
    $region35: #{decode_fused.1} parent=1 // pred_check_branch
      %93 = sbr.rel (0) target = $region37
    $region36: #{decode_fused.1} parent=1 // pred_region
      %94 = dma.done [#allocation5], 256
    $region37: #{decode_fused.1} parent=1 // pred_fallthru
      _
    // Predicated region
    $region38: #{decode_fused.1} parent=1 // pred_check
      _
    $region39: #{decode_fused.1} parent=1 // pred_check_branch
      %96 = sbr.rel (0) target = $region41
    $region40: #{decode_fused.1} parent=1 // pred_region
      %97 = dma.done [#allocation8], 5120
    $region41: #{decode_fused.1} parent=1 // pred_fallthru
      _
    // Predicated region
    $region42: #{decode_fused.1} parent=1 // pred_check
      _
    $region43: #{decode_fused.1} parent=1 // pred_check_branch
      %99 = sbr.rel (0) target = $region45
    $region44: #{decode_fused.1} parent=1 // pred_region
      %100 = dma.done [#allocation8], 2048
    $region45: #{decode_fused.1} parent=1 // pred_fallthru
      _
    // Predicated region
    $region46: #{decode_fused.1} parent=1 // pred_check
      _
    $region47: #{decode_fused.1} parent=1 // pred_check_branch
      %102 = sbr.rel (0) target = $region49
    $region48: #{decode_fused.1} parent=1 // pred_region
      %103 = dma.done [#allocation11], 512
    $region49: #{decode_fused.1} parent=1 // pred_fallthru
      _
    // Predicated region
    $region50: #{decode_fused.1} parent=1 // pred_check
      _
    $region51: #{decode_fused.1} parent=1 // pred_check_branch
      %105 = sbr.rel (0) target = $region53
    $region52: #{decode_fused.1} parent=1 // pred_region
      %106 = dma.done [#allocation11], 512
    $region53: #{decode_fused.1} parent=1 // pred_fallthru
      _
    // Predicated region
    $region54: #{decode_fused.1} parent=1 // pred_check
      _
    $region55: #{decode_fused.1} parent=1 // pred_check_branch
      %108 = sbr.rel (0) target = $region57
    $region56: #{decode_fused.1} parent=1 // pred_region
      %109 = dma.done [#allocation14], 320
    $region57: #{decode_fused.1} parent=1 // pred_fallthru
      _
    %v110 = vld [vmem:[#allocation4] sm:$0xff]
    %v111 = vld [vmem:[#allocation4 + $0x8] sm:$0xff]
    %p112 = scmp.eq.s32.totalorder 0, 0
    // Predicated region
    $region58: #{decode_fused.1} parent=1 // pred_check
      %p113 = pneg %p112
    $region59: #{decode_fused.1} parent=1 // pred_check_branch
      %115 = sbr.rel (%p113) target = $region61
    $region60: #{decode_fused.1} parent=1 // pred_region
      %v116 = vld [vmem:[%s1] sm:$0x3]
      %vm117 = vcmask 254976
      %118 = vst.msk [vmem:[#allocation2] sm:$0x3] %vm117, %v116
      %v119 = vld [vmem:[#allocation12] sm:$0xff]
      %v120 = vld [vmem:[#allocation12 + $0x8] sm:$0xff]
      %v121 = vld [vmem:[#allocation12 + $0x10] sm:$0xff]
      %v122 = vld [vmem:[#allocation12 + $0x18] sm:$0xff]
      %vm123 = vcmask 261120
      %v125 = vsel %vm123, %v110, 0
      %v128 = vsel %vm123, %v111, 0
      %130 = vmatprep.subr.mxu0 0.0
      %131 = vmatpush1.msra.mxu0 0.0
      %132 = vmatprep.subr.mxu0 0.0
      %133 = vmatpush1.msra.mxu0 0.0
      %134 = vmatprep.subr.mxu0 0.0
      %135 = vmatpush1.msra.mxu0 0.0
      %136 = vmatprep.subr.mxu0 0.0
      %137 = vmatpush1.msra.mxu0 0.0
      %138 = vmatprep.subr.mxu0 0.0
      %139 = vmatpush1.msra.mxu0 0.0
      %140 = vmatprep.subr.mxu0 0.0
      %141 = vmatpush1.msra.mxu0 0.0
      %142 = vmatprep.subr.mxu0 0.0
      %143 = vmatpush1.msra.mxu0 0.0
      %144 = vmatprep.subr.mxu0 0.0
      %145 = vmatpush1.msra.mxu0 0.0
      %146 = vmatprep.subr.mxu0 0.0
      %147 = vmatpush1.msra.mxu0 0.0
      %148 = vmatprep.subr.mxu0 0.0
      %149 = vmatpush1.msra.mxu0 0.0
      %150 = vmatprep.subr.mxu0 0.0
      %151 = vmatpush1.msra.mxu0 0.0
      %152 = vmatprep.subr.mxu0 0.0
      %153 = vmatpush1.msra.mxu0 0.0
      %154 = vmatprep.subr.mxu0 0.0
      %155 = vmatpush1.msra.mxu0 %v122
      %156 = vmatprep.subr.mxu0 0.0
      %157 = vmatpush1.msra.mxu0 %v121
      %158 = vmatprep.subr.mxu0 0.0
      %159 = vmatpush1.msra.mxu0 %v120
      %160 = vmatprep.subr.mxu0 0.0
      %161 = vmatpush1.msra.mxu0 %v119
      %162 = vmatprep.subr.mxu0 0.0
      %163 = vmatpush2.msra.mxu0 0.0
      %164 = vmatprep.subr.mxu0 0.0
      %165 = vmatpush2.msra.mxu0 0.0
      %166 = vmatprep.subr.mxu0 0.0
      %167 = vmatpush2.msra.mxu0 0.0
      %168 = vmatprep.subr.mxu0 0.0
      %169 = vmatpush2.msra.mxu0 0.0
      %170 = vmatprep.subr.mxu0 0.0
      %171 = vmatpush2.msra.mxu0 0.0
      %172 = vmatprep.subr.mxu0 0.0
      %173 = vmatpush2.msra.mxu0 0.0
      %174 = vmatprep.subr.mxu0 0.0
      %175 = vmatpush2.msra.mxu0 0.0
      %176 = vmatprep.subr.mxu0 0.0
      %177 = vmatpush2.msra.mxu0 0.0
      %178 = vmatprep.subr.mxu0 0.0
      %179 = vmatpush2.msra.mxu0 0.0
      %180 = vmatprep.subr.mxu0 0.0
      %181 = vmatpush2.msra.mxu0 0.0
      %182 = vmatprep.subr.mxu0 0.0
      %183 = vmatpush2.msra.mxu0 0.0
      %184 = vmatprep.subr.mxu0 0.0
      %185 = vmatpush2.msra.mxu0 0.0
      %186 = vmatprep.subr.mxu0 0.0
      %187 = vmatpush2.msra.mxu0 0.0
      %188 = vmatprep.subr.mxu0 0.0
      %189 = vmatpush2.msra.mxu0 0.0
      %190 = vmatprep.subr.mxu0 0.0
      %191 = vmatpush2.msra.mxu0 0.0
      %192 = vmatprep.subr.mxu0 0.0
      %193 = vmatpush2.msra.mxu0 0.0
      %194 = vmatprep.mubr.f32.mxu0 0.0
      %195 = vmatmul.mubr.f32.gmra.mxu0 %v125
      %v196 = vpop.f32.mrf.mxu0
      %v197 = vadd.f32 0.0, %v196
      %v198 = vpop.f32.mrf.mxu0
      %199 = vmatprep.mubr.f32.mxu0 0.0
      %200 = vmatmul.mubr.f32.gmra.mxu0 %v128
      %v201 = vpop.f32.mrf.mxu0
      %v202 = vadd.f32 0.0, %v201
      %v203 = vpop.f32.mrf.mxu0
      %204 = vdwg.mxu0
      %205 = vst [vmem:[#allocation3] sm:$0xff] %v197
      %206 = vst [vmem:[#allocation3 + $0x8] sm:$0xff] %v202
    $region61: #{decode_fused.1} parent=1 // pred_fallthru
      _
    %v207 = vld [vmem:[%s0] sm:$0x3]
    %v208 = vld [vmem:[#allocation2] sm:$0x3]
    %v209 = vld [vmem:[#allocation13] sm:$0x77]
    %v210 = vld [vmem:[#allocation13 + $0x8] sm:$0x77]
    %v211 = vld [vmem:[#allocation13 + $0x10] sm:$0x7]
    %213 = vrot.lane.b32.xlu0 %v208, 32
    %v214 = vpop.permute.xlu0 %213
    %vm216 = vcmask 261120
    %v217 = vsel %vm216, %v207, %v214
    %v218 = vld [vmem:[#allocation7] sm:$0xff]
    %v219 = vld [vmem:[#allocation7 + $0x8] sm:$0xff]
    %v220 = vld [vmem:[#allocation7 + $0x10] sm:$0xff]
    %v221 = vld [vmem:[#allocation7 + $0x18] sm:$0xff]
    %v222 = vld [vmem:[#allocation7 + $0x20] sm:$0xff]
    %v223 = vld [vmem:[#allocation7 + $0x28] sm:$0xff]
    %v224 = vld [vmem:[#allocation7 + $0x30] sm:$0xff]
    %v225 = vld [vmem:[#allocation7 + $0x38] sm:$0xff]
    %v226 = vld [vmem:[#allocation7 + $0x40] sm:$0xff]
    %v227 = vld [vmem:[#allocation7 + $0x48] sm:$0xff]
    %v228 = vld [vmem:[#allocation7 + $0x50] sm:$0xff]
    %v229 = vld [vmem:[#allocation7 + $0x58] sm:$0xff]
    %v230 = vld [vmem:[#allocation7 + $0x60] sm:$0xff]
    %v231 = vld [vmem:[#allocation7 + $0x68] sm:$0xff]
    %v232 = vld [vmem:[#allocation7 + $0x70] sm:$0xff]
    %v233 = vld [vmem:[#allocation7 + $0x78] sm:$0xff]
    %v234 = vld [vmem:[#allocation7 + $0x80] sm:$0xff]
    %v235 = vld [vmem:[#allocation7 + $0x88] sm:$0xff]
    %v236 = vld [vmem:[#allocation7 + $0x90] sm:$0xff]
    %v237 = vld [vmem:[#allocation7 + $0x98] sm:$0xff]
    %v238 = vld [vmem:[#allocation7 + $0xa0] sm:$0xff]
    %v239 = vld [vmem:[#allocation7 + $0xa8] sm:$0xff]
    %v240 = vld [vmem:[#allocation7 + $0xb0] sm:$0xff]
    %v241 = vld [vmem:[#allocation7 + $0xb8] sm:$0xff]
    %v242 = vld [vmem:[#allocation7 + $0xc0] sm:$0xff]
    %v243 = vld [vmem:[#allocation7 + $0xc8] sm:$0xff]
    %v244 = vld [vmem:[#allocation7 + $0xd0] sm:$0xff]
    %v245 = vld [vmem:[#allocation7 + $0xd8] sm:$0xff]
    %v246 = vld [vmem:[#allocation7 + $0xe0] sm:$0xff]
    %v247 = vld [vmem:[#allocation7 + $0xe8] sm:$0xff]
    %v248 = vld [vmem:[#allocation7 + $0xf0] sm:$0xff]
    %v249 = vld [vmem:[#allocation7 + $0xf8] sm:$0xff]
    %v250 = vld [vmem:[#allocation7 + $0x100] sm:$0xff]
    %v251 = vld [vmem:[#allocation7 + $0x108] sm:$0xff]
    %v252 = vld [vmem:[#allocation7 + $0x110] sm:$0xff]
    %v253 = vld [vmem:[#allocation7 + $0x118] sm:$0xff]
    %v254 = vld [vmem:[#allocation7 + $0x120] sm:$0xff]
    %v255 = vld [vmem:[#allocation7 + $0x128] sm:$0xff]
    %v256 = vld [vmem:[#allocation7 + $0x130] sm:$0xff]
    %v257 = vld [vmem:[#allocation7 + $0x138] sm:$0xff]
    %v261 = vlaneseq
    %v262 = vshrl.u32 %v261, 7
    %v263 = vsub.s32 0, %v262
    %v264 = vrot.slane %v209, %v263
    %v265 = vlaneseq
    %v266 = vshrl.u32 %v265, 7
    %v267 = vsub.s32 4, %v266
    %v268 = vrot.slane %v209, %v267
    %v269 = vlaneseq
    %v270 = vshrl.u32 %v269, 7
    %v271 = vsub.s32 0, %v270
    %v272 = vrot.slane %v210, %v271
    %v273 = vlaneseq
    %v274 = vshrl.u32 %v273, 7
    %v275 = vsub.s32 4, %v274
    %v276 = vrot.slane %v210, %v275
    %v277 = vlaneseq
    %v278 = vshrl.u32 %v277, 7
    %v279 = vsub.s32 0, %v278
    %v280 = vrot.slane %v211, %v279
    %v286 = vlaneseq
    %v287 = vshrl.u32 %v286, 7
    %v288 = vsub.s32 0, %v287
    %v289 = vrot.slane %v264, %v288
    %v290 = vlaneseq
    %v291 = vshrl.u32 %v290, 7
    %v292 = vsub.s32 0, %v291
    %v293 = vrot.slane %v268, %v292
    %v294 = vlaneseq
    %v295 = vshrl.u32 %v294, 7
    %v296 = vsub.s32 0, %v295
    %v297 = vrot.slane %v272, %v296
    %v298 = vlaneseq
    %v299 = vshrl.u32 %v298, 7
    %v300 = vsub.s32 0, %v299
    %v301 = vrot.slane %v276, %v300
    %v302 = vlaneseq
    %v303 = vshrl.u32 %v302, 7
    %v304 = vsub.s32 0, %v303
    %v305 = vrot.slane %v280, %v304
    %vm306 = vcmask 523264
    %v308 = vsel %vm306, %v217, 0
    %310 = vmatprep.subr.mxu0 0.0
    %311 = vmatpush1.msra.mxu0 0.0
    %312 = vmatprep.subr.mxu0 0.0
    %313 = vmatpush1.msra.mxu0 0.0
    %314 = vmatprep.subr.mxu0 0.0
    %315 = vmatpush1.msra.mxu0 0.0
    %316 = vmatprep.subr.mxu0 0.0
    %317 = vmatpush1.msra.mxu0 0.0
    %318 = vmatprep.subr.mxu0 0.0
    %319 = vmatpush1.msra.mxu0 0.0
    %320 = vmatprep.subr.mxu0 0.0
    %321 = vmatpush1.msra.mxu0 0.0
    %322 = vmatprep.subr.mxu0 0.0
    %323 = vmatpush1.msra.mxu0 0.0
    %324 = vmatprep.subr.mxu0 0.0
    %325 = vmatpush1.msra.mxu0 0.0
    %326 = vmatprep.subr.mxu0 %v254
    %327 = vmatpush1.msra.mxu0 %v253
    %328 = vmatprep.subr.mxu0 %v249
    %329 = vmatpush1.msra.mxu0 %v248
    %330 = vmatprep.subr.mxu0 %v244
    %331 = vmatpush1.msra.mxu0 %v243
    %332 = vmatprep.subr.mxu0 %v239
    %333 = vmatpush1.msra.mxu0 %v238
    %334 = vmatprep.subr.mxu0 %v234
    %335 = vmatpush1.msra.mxu0 %v233
    %336 = vmatprep.subr.mxu0 %v229
    %337 = vmatpush1.msra.mxu0 %v228
    %338 = vmatprep.subr.mxu0 %v224
    %339 = vmatpush1.msra.mxu0 %v223
    %340 = vmatprep.subr.mxu0 %v219
    %341 = vmatpush1.msra.mxu0 %v218
    %342 = vmatprep.subr.mxu0 0.0
    %343 = vmatpush2.msra.mxu0 0.0
    %344 = vmatprep.subr.mxu0 0.0
    %345 = vmatpush2.msra.mxu0 0.0
    %346 = vmatprep.subr.mxu0 0.0
    %347 = vmatpush2.msra.mxu0 0.0
    %348 = vmatprep.subr.mxu0 0.0
    %349 = vmatpush2.msra.mxu0 0.0
    %350 = vmatprep.subr.mxu0 0.0
    %351 = vmatpush2.msra.mxu0 0.0
    %352 = vmatprep.subr.mxu0 0.0
    %353 = vmatpush2.msra.mxu0 0.0
    %354 = vmatprep.subr.mxu0 0.0
    %355 = vmatpush2.msra.mxu0 0.0
    %356 = vmatprep.subr.mxu0 0.0
    %357 = vmatpush2.msra.mxu0 0.0
    %358 = vmatprep.subr.mxu0 0.0
    %359 = vmatpush2.msra.mxu0 0.0
    %360 = vmatprep.subr.mxu0 0.0
    %361 = vmatpush2.msra.mxu0 0.0
    %362 = vmatprep.subr.mxu0 0.0
    %363 = vmatpush2.msra.mxu0 0.0
    %364 = vmatprep.subr.mxu0 0.0
    %365 = vmatpush2.msra.mxu0 0.0
    %366 = vmatprep.subr.mxu0 0.0
    %367 = vmatpush2.msra.mxu0 0.0
    %368 = vmatprep.subr.mxu0 0.0
    %369 = vmatpush2.msra.mxu0 0.0
    %370 = vmatprep.subr.mxu0 0.0
    %371 = vmatpush2.msra.mxu0 0.0
    %372 = vmatprep.subr.mxu0 0.0
    %373 = vmatpush2.msra.mxu0 0.0
    %374 = vmatprep.mubr.f32.mxu0 0.0
    %375 = vmatmul.mubr.f32.gmra.mxu0 %v308
    %v376 = vpop.f32.mrf.mxu0
    %v377 = vadd.f32 %v289, %v376
    %v378 = vpop.f32.mrf.mxu0
    %v379 = vadd.f32 %v293, %v378
    %380 = vdwg.mxu0
    %381 = vmatprep.subr.mxu0 0.0
    %382 = vmatpush1.msra.mxu0 0.0
    %383 = vmatprep.subr.mxu0 0.0
    %384 = vmatpush1.msra.mxu0 0.0
    %385 = vmatprep.subr.mxu0 0.0
    %386 = vmatpush1.msra.mxu0 0.0
    %387 = vmatprep.subr.mxu0 0.0
    %388 = vmatpush1.msra.mxu0 0.0
    %389 = vmatprep.subr.mxu0 0.0
    %390 = vmatpush1.msra.mxu0 0.0
    %391 = vmatprep.subr.mxu0 0.0
    %392 = vmatpush1.msra.mxu0 0.0
    %393 = vmatprep.subr.mxu0 0.0
    %394 = vmatpush1.msra.mxu0 0.0
    %395 = vmatprep.subr.mxu0 0.0
    %396 = vmatpush1.msra.mxu0 0.0
    %397 = vmatprep.subr.mxu0 %v256
    %398 = vmatpush1.msra.mxu0 %v255
    %399 = vmatprep.subr.mxu0 %v251
    %400 = vmatpush1.msra.mxu0 %v250
    %401 = vmatprep.subr.mxu0 %v246
    %402 = vmatpush1.msra.mxu0 %v245
    %403 = vmatprep.subr.mxu0 %v241
    %404 = vmatpush1.msra.mxu0 %v240
    %405 = vmatprep.subr.mxu0 %v236
    %406 = vmatpush1.msra.mxu0 %v235
    %407 = vmatprep.subr.mxu0 %v231
    %408 = vmatpush1.msra.mxu0 %v230
    %409 = vmatprep.subr.mxu0 %v226
    %410 = vmatpush1.msra.mxu0 %v225
    %411 = vmatprep.subr.mxu0 %v221
    %412 = vmatpush1.msra.mxu0 %v220
    %413 = vmatprep.subr.mxu0 0.0
    %414 = vmatpush2.msra.mxu0 0.0
    %415 = vmatprep.subr.mxu0 0.0
    %416 = vmatpush2.msra.mxu0 0.0
    %417 = vmatprep.subr.mxu0 0.0
    %418 = vmatpush2.msra.mxu0 0.0
    %419 = vmatprep.subr.mxu0 0.0
    %420 = vmatpush2.msra.mxu0 0.0
    %421 = vmatprep.subr.mxu0 0.0
    %422 = vmatpush2.msra.mxu0 0.0
    %423 = vmatprep.subr.mxu0 0.0
    %424 = vmatpush2.msra.mxu0 0.0
    %425 = vmatprep.subr.mxu0 0.0
    %426 = vmatpush2.msra.mxu0 0.0
    %427 = vmatprep.subr.mxu0 0.0
    %428 = vmatpush2.msra.mxu0 0.0
    %429 = vmatprep.subr.mxu0 0.0
    %430 = vmatpush2.msra.mxu0 0.0
    %431 = vmatprep.subr.mxu0 0.0
    %432 = vmatpush2.msra.mxu0 0.0
    %433 = vmatprep.subr.mxu0 0.0
    %434 = vmatpush2.msra.mxu0 0.0
    %435 = vmatprep.subr.mxu0 0.0
    %436 = vmatpush2.msra.mxu0 0.0
    %437 = vmatprep.subr.mxu0 0.0
    %438 = vmatpush2.msra.mxu0 0.0
    %439 = vmatprep.subr.mxu0 0.0
    %440 = vmatpush2.msra.mxu0 0.0
    %441 = vmatprep.subr.mxu0 0.0
    %442 = vmatpush2.msra.mxu0 0.0
    %443 = vmatprep.subr.mxu0 0.0
    %444 = vmatpush2.msra.mxu0 0.0
    %445 = vmatprep.mubr.f32.mxu0 0.0
    %446 = vmatmul.mubr.f32.gmra.mxu0 %v308
    %v447 = vpop.f32.mrf.mxu0
    %v448 = vadd.f32 %v297, %v447
    %v449 = vpop.f32.mrf.mxu0
    %v450 = vadd.f32 %v301, %v449
    %451 = vdwg.mxu0
    %452 = vmatprep.subr.mxu0 0.0
    %453 = vmatpush1.msra.mxu0 0.0
    %454 = vmatprep.subr.mxu0 0.0
    %455 = vmatpush1.msra.mxu0 0.0
    %456 = vmatprep.subr.mxu0 0.0
    %457 = vmatpush1.msra.mxu0 0.0
    %458 = vmatprep.subr.mxu0 0.0
    %459 = vmatpush1.msra.mxu0 0.0
    %460 = vmatprep.subr.mxu0 0.0
    %461 = vmatpush1.msra.mxu0 0.0
    %462 = vmatprep.subr.mxu0 0.0
    %463 = vmatpush1.msra.mxu0 0.0
    %464 = vmatprep.subr.mxu0 0.0
    %465 = vmatpush1.msra.mxu0 0.0
    %466 = vmatprep.subr.mxu0 0.0
    %467 = vmatpush1.msra.mxu0 0.0
    %468 = vmatprep.subr.mxu0 0.0
    %469 = vmatpush1.msra.mxu0 %v257
    %470 = vmatprep.subr.mxu0 0.0
    %471 = vmatpush1.msra.mxu0 %v252
    %472 = vmatprep.subr.mxu0 0.0
    %473 = vmatpush1.msra.mxu0 %v247
    %474 = vmatprep.subr.mxu0 0.0
    %475 = vmatpush1.msra.mxu0 %v242
    %476 = vmatprep.subr.mxu0 0.0
    %477 = vmatpush1.msra.mxu0 %v237
    %478 = vmatprep.subr.mxu0 0.0
    %479 = vmatpush1.msra.mxu0 %v232
    %480 = vmatprep.subr.mxu0 0.0
    %481 = vmatpush1.msra.mxu0 %v227
    %482 = vmatprep.subr.mxu0 0.0
    %483 = vmatpush1.msra.mxu0 %v222
    %484 = vmatprep.subr.mxu0 0.0
    %485 = vmatpush2.msra.mxu0 0.0
    %486 = vmatprep.subr.mxu0 0.0
    %487 = vmatpush2.msra.mxu0 0.0
    %488 = vmatprep.subr.mxu0 0.0
    %489 = vmatpush2.msra.mxu0 0.0
    %490 = vmatprep.subr.mxu0 0.0
    %491 = vmatpush2.msra.mxu0 0.0
    %492 = vmatprep.subr.mxu0 0.0
    %493 = vmatpush2.msra.mxu0 0.0
    %494 = vmatprep.subr.mxu0 0.0
    %495 = vmatpush2.msra.mxu0 0.0
    %496 = vmatprep.subr.mxu0 0.0
    %497 = vmatpush2.msra.mxu0 0.0
    %498 = vmatprep.subr.mxu0 0.0
    %499 = vmatpush2.msra.mxu0 0.0
    %500 = vmatprep.subr.mxu0 0.0
    %501 = vmatpush2.msra.mxu0 0.0
    %502 = vmatprep.subr.mxu0 0.0
    %503 = vmatpush2.msra.mxu0 0.0
    %504 = vmatprep.subr.mxu0 0.0
    %505 = vmatpush2.msra.mxu0 0.0
    %506 = vmatprep.subr.mxu0 0.0
    %507 = vmatpush2.msra.mxu0 0.0
    %508 = vmatprep.subr.mxu0 0.0
    %509 = vmatpush2.msra.mxu0 0.0
    %510 = vmatprep.subr.mxu0 0.0
    %511 = vmatpush2.msra.mxu0 0.0
    %512 = vmatprep.subr.mxu0 0.0
    %513 = vmatpush2.msra.mxu0 0.0
    %514 = vmatprep.subr.mxu0 0.0
    %515 = vmatpush2.msra.mxu0 0.0
    %516 = vmatprep.mubr.f32.mxu0 0.0
    %517 = vmatmul.mubr.f32.gmra.mxu0 %v308
    %v518 = vpop.f32.mrf.mxu0
    %v519 = vadd.f32 %v305, %v518
    %v520 = vpop.f32.mrf.mxu0
    %521 = vdwg.mxu0
    %v522 = vld [vmem:[#allocation3] sm:$0xff]
    %v523 = vld [vmem:[#allocation3 + $0x8] sm:$0xff]
    %v526 = vunpack.c.l.s4 1966171168
    %v527 = vunpack.c.0.s8 %v526
    %v528 = vlaneseq
    %v529 = vshrl.u32 %v528, 7
    %v530 = vsub.s32 %v527, %v529
    %v531 = vrot.slane %v377, %v530
    %v532 = vcombine.high %v531, %v531
    %v534 = vunpack.c.l.s4 1966171168
    %v535 = vunpack.c.0.s8 %v534
    %v536 = vlaneseq
    %v537 = vshrl.u32 %v536, 7
    %v538 = vsub.s32 %v535, %v537
    %v539 = vrot.slane %v531, %v538
    %v541 = vunpack.c.l.s4 1966171168
    %v542 = vunpack.c.0.s8 %v541
    %v543 = vlaneseq
    %v544 = vshrl.u32 %v543, 7
    %v545 = vsub.s32 %v542, %v544
    %v546 = vrot.slane %v532, %v545
    %v547 = vlaneseq
    %v548 = vshrl.u32 %v547, 7
    %v549 = vsub.s32 0, %v548
    %v550 = vrot.slane %v539, %v549
    %v551 = vlaneseq
    %v552 = vshrl.u32 %v551, 7
    %v553 = vsub.s32 0, %v552
    %v554 = vrot.slane %v546, %v553
    %v557 = vadd.f32 %v522, %v550
    %v558 = vadd.f32 %v523, %v554
    %v559 = vmax.f32 %v557, 0.0
    %v560 = vmax.f32 %v558, 0.0
    %v561 = vlaneseq
    %v562 = vshrl.u32 %v561, 7
    %v563 = vsub.s32 2, %v562
    %v564 = vrot.slane %v209, %v563
    %v565 = vmul.f32 %v559, %v564
    %v566 = vmul.f32 %v560, %v564
    %567 = vadd.xlane.f32.xlu0 %v565
    %v568 = vpop.xlane.xlu0 %567
    %569 = vadd.xlane.f32.xlu0 %v566
    %v570 = vpop.xlane.xlu0 %569
    %v573 = vlaneseq
    %v574 = vand.u32 %v573, 127
    %v575 = vlaneseq
    %v576 = vshrl.u32 %v575, 7
    %v577 = vsub.s32 %v574, %v576
    %v578 = vrot.slane %v568, %v577
    %v579 = vlaneseq
    %v580 = vshrl.u32 %v579, 7
    %v581 = vsub.s32 %v574, %v580
    %v582 = vrot.slane %v570, %v581
    %vm583 = vcmask 1041409
    %v584 = vsel %vm583, %v582, %v578
    %vm586 = vcmask 58368
    %v587 = vsel %vm586, %v584, -inf
    %588 = vmax.xlane.f32.xlu0 %v587
    %v589 = vpop.xlane.xlu0 %588
    %v591 = vlaneseq
    %v592 = vshrl.u32 %v591, 7
    %v593 = vsub.s32 0, %v592
    %v594 = vrot.slane %v589, %v593
    %v595 = vlaneseq
    %v596 = vshrl.u32 %v595, 7
    %v597 = vsub.s32 1, %v596
    %v598 = vrot.slane %v589, %v597
    %v601 = vsub.f32 %v568, %v594
    %v602 = vsub.f32 %v570, %v598
    %v603 = vmul.f32 %v601, 1.442695
    %v604 = vpow.pop %v603
    %v605 = vmul.f32 %v602, 1.442695
    %v606 = vpow.pop %v605
    %609 = vset.pattern.permute.xlu0 0
    %610 = vperm.xlu0 %609, %v604
    %v611 = vpop.permute.xlu0 %610
    %612 = vset.pattern.permute.xlu0 0
    %613 = vperm.xlu0 %612, %v606
    %v614 = vpop.permute.xlu0 %613
    %v615 = vlaneseq
    %v616 = vshrl.u32 %v615, 7
    %v617 = vsub.s32 %v574, %v616
    %v618 = vrot.slane %v611, %v617
    %v619 = vlaneseq
    %v620 = vshrl.u32 %v619, 7
    %v621 = vsub.s32 %v574, %v620
    %v622 = vrot.slane %v614, %v621
    %v623 = vsel %vm583, %v622, %v618
    %v625 = vsel %vm586, %v623, 0.0
    %626 = vadd.xlane.f32.xlu0 %v625
    %v627 = vpop.xlane.xlu0 %626
    %v628 = vrcp.pop %v627
    %v630 = vlaneseq
    %v631 = vshrl.u32 %v630, 7
    %v632 = vsub.s32 0, %v631
    %v633 = vrot.slane %v628, %v632
    %v634 = vlaneseq
    %v635 = vshrl.u32 %v634, 7
    %v636 = vsub.s32 1, %v635
    %v637 = vrot.slane %v628, %v636
    %v640 = vmul.f32 %v604, %v633
    %v641 = vmul.f32 %v606, %v637
    %643 = vset.pattern.permute.xlu0 0
    %644 = vperm.xlu0 %643, %v640
    %v645 = vpop.permute.xlu0 %644
    %v646 = vlaneseq
    %v647 = vshrl.u32 %v646, 7
    %v648 = vsub.s32 %v574, %v647
    %v649 = vrot.slane %v645, %v648
    %vm650 = vcmask 64512
    %v651 = vsel %vm650, %v649, 0
    %653 = vmatprep.subr.mxu0 0.0
    %654 = vmatpush1.msra.mxu0 0.0
    %655 = vmatprep.subr.mxu0 0.0
    %656 = vmatpush1.msra.mxu0 0.0
    %657 = vmatprep.subr.mxu0 0.0
    %658 = vmatpush1.msra.mxu0 0.0
    %659 = vmatprep.subr.mxu0 0.0
    %660 = vmatpush1.msra.mxu0 0.0
    %661 = vmatprep.subr.mxu0 0.0
    %662 = vmatpush1.msra.mxu0 0.0
    %663 = vmatprep.subr.mxu0 0.0
    %664 = vmatpush1.msra.mxu0 0.0
    %665 = vmatprep.subr.mxu0 0.0
    %666 = vmatpush1.msra.mxu0 0.0
    %667 = vmatprep.subr.mxu0 0.0
    %668 = vmatpush1.msra.mxu0 0.0
    %669 = vmatprep.subr.mxu0 0.0
    %670 = vmatpush1.msra.mxu0 0.0
    %671 = vmatprep.subr.mxu0 0.0
    %672 = vmatpush1.msra.mxu0 0.0
    %673 = vmatprep.subr.mxu0 0.0
    %674 = vmatpush1.msra.mxu0 0.0
    %675 = vmatprep.subr.mxu0 0.0
    %676 = vmatpush1.msra.mxu0 0.0
    %677 = vmatprep.subr.mxu0 0.0
    %678 = vmatpush1.msra.mxu0 0.0
    %679 = vmatprep.subr.mxu0 0.0
    %680 = vmatpush1.msra.mxu0 0.0
    %681 = vmatprep.subr.mxu0 0.0
    %682 = vmatpush1.msra.mxu0 0.0
    %683 = vmatprep.subr.mxu0 0.0
    %684 = vmatpush1.msra.mxu0 %v110
    %685 = vmatprep.subr.mxu0 0.0
    %686 = vmatpush2.msra.mxu0 0.0
    %687 = vmatprep.subr.mxu0 0.0
    %688 = vmatpush2.msra.mxu0 0.0
    %689 = vmatprep.subr.mxu0 0.0
    %690 = vmatpush2.msra.mxu0 0.0
    %691 = vmatprep.subr.mxu0 0.0
    %692 = vmatpush2.msra.mxu0 0.0
    %693 = vmatprep.subr.mxu0 0.0
    %694 = vmatpush2.msra.mxu0 0.0
    %695 = vmatprep.subr.mxu0 0.0
    %696 = vmatpush2.msra.mxu0 0.0
    %697 = vmatprep.subr.mxu0 0.0
    %698 = vmatpush2.msra.mxu0 0.0
    %699 = vmatprep.subr.mxu0 0.0
    %700 = vmatpush2.msra.mxu0 0.0
    %701 = vmatprep.subr.mxu0 0.0
    %702 = vmatpush2.msra.mxu0 0.0
    %703 = vmatprep.subr.mxu0 0.0
    %704 = vmatpush2.msra.mxu0 0.0
    %705 = vmatprep.subr.mxu0 0.0
    %706 = vmatpush2.msra.mxu0 0.0
    %707 = vmatprep.subr.mxu0 0.0
    %708 = vmatpush2.msra.mxu0 0.0
    %709 = vmatprep.subr.mxu0 0.0
    %710 = vmatpush2.msra.mxu0 0.0
    %711 = vmatprep.subr.mxu0 0.0
    %712 = vmatpush2.msra.mxu0 0.0
    %713 = vmatprep.subr.mxu0 0.0
    %714 = vmatpush2.msra.mxu0 0.0
    %715 = vmatprep.subr.mxu0 0.0
    %716 = vmatpush2.msra.mxu0 0.0
    %717 = vmatprep.mubr.f32.mxu0 0.0
    %718 = vmatmul.mubr.f32.gmra.mxu0 %v651
    %v719 = vpop.f32.mrf.mxu0
    %v720 = vadd.f32 0.0, %v719
    %v721 = vpop.f32.mrf.mxu0
    %722 = vdwg.mxu0
    %724 = vset.pattern.permute.xlu0 0
    %725 = vperm.xlu0 %724, %v641
    %v726 = vpop.permute.xlu0 %725
    %v727 = vlaneseq
    %v728 = vshrl.u32 %v727, 7
    %v729 = vsub.s32 %v574, %v728
    %v730 = vrot.slane %v726, %v729
    %v731 = vsel %vm650, %v730, 0
    %733 = vmatprep.subr.mxu0 0.0
    %734 = vmatpush1.msra.mxu0 0.0
    %735 = vmatprep.subr.mxu0 0.0
    %736 = vmatpush1.msra.mxu0 0.0
    %737 = vmatprep.subr.mxu0 0.0
    %738 = vmatpush1.msra.mxu0 0.0
    %739 = vmatprep.subr.mxu0 0.0
    %740 = vmatpush1.msra.mxu0 0.0
    %741 = vmatprep.subr.mxu0 0.0
    %742 = vmatpush1.msra.mxu0 0.0
    %743 = vmatprep.subr.mxu0 0.0
    %744 = vmatpush1.msra.mxu0 0.0
    %745 = vmatprep.subr.mxu0 0.0
    %746 = vmatpush1.msra.mxu0 0.0
    %747 = vmatprep.subr.mxu0 0.0
    %748 = vmatpush1.msra.mxu0 0.0
    %749 = vmatprep.subr.mxu0 0.0
    %750 = vmatpush1.msra.mxu0 0.0
    %751 = vmatprep.subr.mxu0 0.0
    %752 = vmatpush1.msra.mxu0 0.0
    %753 = vmatprep.subr.mxu0 0.0
    %754 = vmatpush1.msra.mxu0 0.0
    %755 = vmatprep.subr.mxu0 0.0
    %756 = vmatpush1.msra.mxu0 0.0
    %757 = vmatprep.subr.mxu0 0.0
    %758 = vmatpush1.msra.mxu0 0.0
    %759 = vmatprep.subr.mxu0 0.0
    %760 = vmatpush1.msra.mxu0 0.0
    %761 = vmatprep.subr.mxu0 0.0
    %762 = vmatpush1.msra.mxu0 0.0
    %763 = vmatprep.subr.mxu0 0.0
    %764 = vmatpush1.msra.mxu0 %v111
    %765 = vmatprep.subr.mxu0 0.0
    %766 = vmatpush2.msra.mxu0 0.0
    %767 = vmatprep.subr.mxu0 0.0
    %768 = vmatpush2.msra.mxu0 0.0
    %769 = vmatprep.subr.mxu0 0.0
    %770 = vmatpush2.msra.mxu0 0.0
    %771 = vmatprep.subr.mxu0 0.0
    %772 = vmatpush2.msra.mxu0 0.0
    %773 = vmatprep.subr.mxu0 0.0
    %774 = vmatpush2.msra.mxu0 0.0
    %775 = vmatprep.subr.mxu0 0.0
    %776 = vmatpush2.msra.mxu0 0.0
    %777 = vmatprep.subr.mxu0 0.0
    %778 = vmatpush2.msra.mxu0 0.0
    %779 = vmatprep.subr.mxu0 0.0
    %780 = vmatpush2.msra.mxu0 0.0
    %781 = vmatprep.subr.mxu0 0.0
    %782 = vmatpush2.msra.mxu0 0.0
    %783 = vmatprep.subr.mxu0 0.0
    %784 = vmatpush2.msra.mxu0 0.0
    %785 = vmatprep.subr.mxu0 0.0
    %786 = vmatpush2.msra.mxu0 0.0
    %787 = vmatprep.subr.mxu0 0.0
    %788 = vmatpush2.msra.mxu0 0.0
    %789 = vmatprep.subr.mxu0 0.0
    %790 = vmatpush2.msra.mxu0 0.0
    %791 = vmatprep.subr.mxu0 0.0
    %792 = vmatpush2.msra.mxu0 0.0
    %793 = vmatprep.subr.mxu0 0.0
    %794 = vmatpush2.msra.mxu0 0.0
    %795 = vmatprep.subr.mxu0 0.0
    %796 = vmatpush2.msra.mxu0 0.0
    %797 = vmatprep.mubr.f32.mxu0 0.0
    %798 = vmatmul.mubr.f32.gmra.mxu0 %v731
    %v799 = vpop.f32.mrf.mxu0
    %v800 = vadd.f32 0.0, %v799
    %v801 = vpop.f32.mrf.mxu0
    %802 = vdwg.mxu0
    %v803 = vld [vmem:[#allocation9] sm:$0xff]
    %v804 = vld [vmem:[#allocation9 + $0x8] sm:$0xff]
    %v805 = vld [vmem:[#allocation9 + $0x10] sm:$0xff]
    %v806 = vld [vmem:[#allocation9 + $0x18] sm:$0xff]
    %v807 = vld [vmem:[#allocation9 + $0x20] sm:$0xff]
    %v808 = vld [vmem:[#allocation9 + $0x28] sm:$0xff]
    %v809 = vld [vmem:[#allocation9 + $0x30] sm:$0xff]
    %v810 = vld [vmem:[#allocation9 + $0x38] sm:$0xff]
    %v811 = vld [vmem:[#allocation9 + $0x40] sm:$0xff]
    %v812 = vld [vmem:[#allocation9 + $0x48] sm:$0xff]
    %v813 = vld [vmem:[#allocation9 + $0x50] sm:$0xff]
    %v814 = vld [vmem:[#allocation9 + $0x58] sm:$0xff]
    %v815 = vld [vmem:[#allocation9 + $0x60] sm:$0xff]
    %v816 = vld [vmem:[#allocation9 + $0x68] sm:$0xff]
    %v817 = vld [vmem:[#allocation9 + $0x70] sm:$0xff]
    %v818 = vld [vmem:[#allocation9 + $0x78] sm:$0xff]
    %v819 = vlaneseq
    %v820 = vshrl.u32 %v819, 7
    %v821 = vsub.s32 1, %v820
    %v822 = vrot.slane %v209, %v821
    %v823 = vlaneseq
    %v824 = vshrl.u32 %v823, 7
    %v825 = vsub.s32 5, %v824
    %v826 = vrot.slane %v209, %v825
    %v827 = vlaneseq
    %v828 = vshrl.u32 %v827, 7
    %v829 = vsub.s32 1, %v828
    %v830 = vrot.slane %v210, %v829
    %v831 = vlaneseq
    %v832 = vshrl.u32 %v831, 7
    %v833 = vsub.s32 5, %v832
    %v834 = vrot.slane %v210, %v833
    %v839 = vlaneseq
    %v840 = vshrl.u32 %v839, 7
    %v841 = vsub.s32 1, %v840
    %v842 = vrot.slane %v822, %v841
    %v843 = vlaneseq
    %v844 = vshrl.u32 %v843, 7
    %v845 = vsub.s32 1, %v844
    %v846 = vrot.slane %v826, %v845
    %v847 = vlaneseq
    %v848 = vshrl.u32 %v847, 7
    %v849 = vsub.s32 1, %v848
    %v850 = vrot.slane %v830, %v849
    %v851 = vlaneseq
    %v852 = vshrl.u32 %v851, 7
    %v853 = vsub.s32 1, %v852
    %v854 = vrot.slane %v834, %v853
    %v857 = vrot.slane %v800, 7
    %v858 = vsel %vm583, %v857, %v720
    %v859 = vsel %vm216, %v858, 0
    %861 = vmatprep.subr.mxu0 0.0
    %862 = vmatpush1.msra.mxu0 0.0
    %863 = vmatprep.subr.mxu0 0.0
    %864 = vmatpush1.msra.mxu0 0.0
    %865 = vmatprep.subr.mxu0 0.0
    %866 = vmatpush1.msra.mxu0 0.0
    %867 = vmatprep.subr.mxu0 0.0
    %868 = vmatpush1.msra.mxu0 0.0
    %869 = vmatprep.subr.mxu0 0.0
    %870 = vmatpush1.msra.mxu0 0.0
    %871 = vmatprep.subr.mxu0 0.0
    %872 = vmatpush1.msra.mxu0 0.0
    %873 = vmatprep.subr.mxu0 0.0
    %874 = vmatpush1.msra.mxu0 0.0
    %875 = vmatprep.subr.mxu0 0.0
    %876 = vmatpush1.msra.mxu0 0.0
    %877 = vmatprep.subr.mxu0 0.0
    %878 = vmatpush1.msra.mxu0 0.0
    %879 = vmatprep.subr.mxu0 0.0
    %880 = vmatpush1.msra.mxu0 0.0
    %881 = vmatprep.subr.mxu0 0.0
    %882 = vmatpush1.msra.mxu0 0.0
    %883 = vmatprep.subr.mxu0 0.0
    %884 = vmatpush1.msra.mxu0 0.0
    %885 = vmatprep.subr.mxu0 %v816
    %886 = vmatpush1.msra.mxu0 %v815
    %887 = vmatprep.subr.mxu0 %v812
    %888 = vmatpush1.msra.mxu0 %v811
    %889 = vmatprep.subr.mxu0 %v808
    %890 = vmatpush1.msra.mxu0 %v807
    %891 = vmatprep.subr.mxu0 %v804
    %892 = vmatpush1.msra.mxu0 %v803
    %893 = vmatprep.subr.mxu0 0.0
    %894 = vmatpush2.msra.mxu0 0.0
    %895 = vmatprep.subr.mxu0 0.0
    %896 = vmatpush2.msra.mxu0 0.0
    %897 = vmatprep.subr.mxu0 0.0
    %898 = vmatpush2.msra.mxu0 0.0
    %899 = vmatprep.subr.mxu0 0.0
    %900 = vmatpush2.msra.mxu0 0.0
    %901 = vmatprep.subr.mxu0 0.0
    %902 = vmatpush2.msra.mxu0 0.0
    %903 = vmatprep.subr.mxu0 0.0
    %904 = vmatpush2.msra.mxu0 0.0
    %905 = vmatprep.subr.mxu0 0.0
    %906 = vmatpush2.msra.mxu0 0.0
    %907 = vmatprep.subr.mxu0 0.0
    %908 = vmatpush2.msra.mxu0 0.0
    %909 = vmatprep.subr.mxu0 0.0
    %910 = vmatpush2.msra.mxu0 0.0
    %911 = vmatprep.subr.mxu0 0.0
    %912 = vmatpush2.msra.mxu0 0.0
    %913 = vmatprep.subr.mxu0 0.0
    %914 = vmatpush2.msra.mxu0 0.0
    %915 = vmatprep.subr.mxu0 0.0
    %916 = vmatpush2.msra.mxu0 0.0
    %917 = vmatprep.subr.mxu0 0.0
    %918 = vmatpush2.msra.mxu0 0.0
    %919 = vmatprep.subr.mxu0 0.0
    %920 = vmatpush2.msra.mxu0 0.0
    %921 = vmatprep.subr.mxu0 0.0
    %922 = vmatpush2.msra.mxu0 0.0
    %923 = vmatprep.subr.mxu0 0.0
    %924 = vmatpush2.msra.mxu0 0.0
    %925 = vmatprep.mubr.f32.mxu0 0.0
    %926 = vmatmul.mubr.f32.gmra.mxu0 %v859
    %v927 = vpop.f32.mrf.mxu0
    %v928 = vadd.f32 %v842, %v927
    %v929 = vpop.f32.mrf.mxu0
    %v930 = vadd.f32 %v846, %v929
    %931 = vdwg.mxu0
    %932 = vmatprep.subr.mxu0 0.0
    %933 = vmatpush1.msra.mxu0 0.0
    %934 = vmatprep.subr.mxu0 0.0
    %935 = vmatpush1.msra.mxu0 0.0
    %936 = vmatprep.subr.mxu0 0.0
    %937 = vmatpush1.msra.mxu0 0.0
    %938 = vmatprep.subr.mxu0 0.0
    %939 = vmatpush1.msra.mxu0 0.0
    %940 = vmatprep.subr.mxu0 0.0
    %941 = vmatpush1.msra.mxu0 0.0
    %942 = vmatprep.subr.mxu0 0.0
    %943 = vmatpush1.msra.mxu0 0.0
    %944 = vmatprep.subr.mxu0 0.0
    %945 = vmatpush1.msra.mxu0 0.0
    %946 = vmatprep.subr.mxu0 0.0
    %947 = vmatpush1.msra.mxu0 0.0
    %948 = vmatprep.subr.mxu0 0.0
    %949 = vmatpush1.msra.mxu0 0.0
    %950 = vmatprep.subr.mxu0 0.0
    %951 = vmatpush1.msra.mxu0 0.0
    %952 = vmatprep.subr.mxu0 0.0
    %953 = vmatpush1.msra.mxu0 0.0
    %954 = vmatprep.subr.mxu0 0.0
    %955 = vmatpush1.msra.mxu0 0.0
    %956 = vmatprep.subr.mxu0 %v818
    %957 = vmatpush1.msra.mxu0 %v817
    %958 = vmatprep.subr.mxu0 %v814
    %959 = vmatpush1.msra.mxu0 %v813
    %960 = vmatprep.subr.mxu0 %v810
    %961 = vmatpush1.msra.mxu0 %v809
    %962 = vmatprep.subr.mxu0 %v806
    %963 = vmatpush1.msra.mxu0 %v805
    %964 = vmatprep.subr.mxu0 0.0
    %965 = vmatpush2.msra.mxu0 0.0
    %966 = vmatprep.subr.mxu0 0.0
    %967 = vmatpush2.msra.mxu0 0.0
    %968 = vmatprep.subr.mxu0 0.0
    %969 = vmatpush2.msra.mxu0 0.0
    %970 = vmatprep.subr.mxu0 0.0
    %971 = vmatpush2.msra.mxu0 0.0
    %972 = vmatprep.subr.mxu0 0.0
    %973 = vmatpush2.msra.mxu0 0.0
    %974 = vmatprep.subr.mxu0 0.0
    %975 = vmatpush2.msra.mxu0 0.0
    %976 = vmatprep.subr.mxu0 0.0
    %977 = vmatpush2.msra.mxu0 0.0
    %978 = vmatprep.subr.mxu0 0.0
    %979 = vmatpush2.msra.mxu0 0.0
    %980 = vmatprep.subr.mxu0 0.0
    %981 = vmatpush2.msra.mxu0 0.0
    %982 = vmatprep.subr.mxu0 0.0
    %983 = vmatpush2.msra.mxu0 0.0
    %984 = vmatprep.subr.mxu0 0.0
    %985 = vmatpush2.msra.mxu0 0.0
    %986 = vmatprep.subr.mxu0 0.0
    %987 = vmatpush2.msra.mxu0 0.0
    %988 = vmatprep.subr.mxu0 0.0
    %989 = vmatpush2.msra.mxu0 0.0
    %990 = vmatprep.subr.mxu0 0.0
    %991 = vmatpush2.msra.mxu0 0.0
    %992 = vmatprep.subr.mxu0 0.0
    %993 = vmatpush2.msra.mxu0 0.0
    %994 = vmatprep.subr.mxu0 0.0
    %995 = vmatpush2.msra.mxu0 0.0
    %996 = vmatprep.mubr.f32.mxu0 0.0
    %997 = vmatmul.mubr.f32.gmra.mxu0 %v859
    %v998 = vpop.f32.mrf.mxu0
    %v999 = vadd.f32 %v850, %v998
    %v1000 = vpop.f32.mrf.mxu0
    %v1001 = vadd.f32 %v854, %v1000
    %1002 = vdwg.mxu0
    %v1003 = vadd.f32 %v379, %v928
    %v1004 = vxor.u32 %v1003, 2147483648
    %v1005 = vmul.f32 %v1004, 1.442695
    %v1006 = vpow.pop %v1005
    %v1007 = vadd.f32 %v1006, 1.0
    %v1008 = vrcp.pop %v1007
    %v1009 = vmul.f32 1.0, %v1008
    %v1010 = vadd.f32 %v448, %v930
    %v1011 = vxor.u32 %v1010, 2147483648
    %v1012 = vmul.f32 %v1011, 1.442695
    %v1013 = vpow.pop %v1012
    %v1014 = vadd.f32 %v1013, 1.0
    %v1015 = vrcp.pop %v1014
    %v1016 = vmul.f32 1.0, %v1015
    %v1017 = vadd.f32 %v450, %v999
    %v1018 = vmul.f32 %v1009, %v519
    %v1019 = vadd.f32 %v1017, %v1018
    %v1020 = vtanh.pop %v1019
    %v1021 = vsub.f32 1.0, %v1016
    %v1022 = vmul.f32 %v1021, %v1020
    %v1023 = vmul.f32 %v1016, %v208
    %v1024 = vadd.f32 %v1022, %v1023
    %vm1025 = vcmask 254976
    %1026 = vst.msk [vmem:[#allocation2] sm:$0x3] %vm1025, %v1024
    %v1027 = vld [vmem:[#allocation10] sm:$0xff]
    %v1028 = vld [vmem:[#allocation10 + $0x8] sm:$0xff]
    %v1029 = vld [vmem:[#allocation10 + $0x10] sm:$0xff]
    %v1030 = vld [vmem:[#allocation10 + $0x18] sm:$0xff]
    %v1032 = vsel %vm216, %v1024, 0
    %1034 = vmatprep.subr.mxu0 0.0
    %1035 = vmatpush1.msra.mxu0 0.0
    %1036 = vmatprep.subr.mxu0 0.0
    %1037 = vmatpush1.msra.mxu0 0.0
    %1038 = vmatprep.subr.mxu0 0.0
    %1039 = vmatpush1.msra.mxu0 0.0
    %1040 = vmatprep.subr.mxu0 0.0
    %1041 = vmatpush1.msra.mxu0 0.0
    %1042 = vmatprep.subr.mxu0 0.0
    %1043 = vmatpush1.msra.mxu0 0.0
    %1044 = vmatprep.subr.mxu0 0.0
    %1045 = vmatpush1.msra.mxu0 0.0
    %1046 = vmatprep.subr.mxu0 0.0
    %1047 = vmatpush1.msra.mxu0 0.0
    %1048 = vmatprep.subr.mxu0 0.0
    %1049 = vmatpush1.msra.mxu0 0.0
    %1050 = vmatprep.subr.mxu0 0.0
    %1051 = vmatpush1.msra.mxu0 0.0
    %1052 = vmatprep.subr.mxu0 0.0
    %1053 = vmatpush1.msra.mxu0 0.0
    %1054 = vmatprep.subr.mxu0 0.0
    %1055 = vmatpush1.msra.mxu0 0.0
    %1056 = vmatprep.subr.mxu0 0.0
    %1057 = vmatpush1.msra.mxu0 0.0
    %1058 = vmatprep.subr.mxu0 0.0
    %1059 = vmatpush1.msra.mxu0 %v1030
    %1060 = vmatprep.subr.mxu0 0.0
    %1061 = vmatpush1.msra.mxu0 %v1029
    %1062 = vmatprep.subr.mxu0 0.0
    %1063 = vmatpush1.msra.mxu0 %v1028
    %1064 = vmatprep.subr.mxu0 0.0
    %1065 = vmatpush1.msra.mxu0 %v1027
    %1066 = vmatprep.subr.mxu0 0.0
    %1067 = vmatpush2.msra.mxu0 0.0
    %1068 = vmatprep.subr.mxu0 0.0
    %1069 = vmatpush2.msra.mxu0 0.0
    %1070 = vmatprep.subr.mxu0 0.0
    %1071 = vmatpush2.msra.mxu0 0.0
    %1072 = vmatprep.subr.mxu0 0.0
    %1073 = vmatpush2.msra.mxu0 0.0
    %1074 = vmatprep.subr.mxu0 0.0
    %1075 = vmatpush2.msra.mxu0 0.0
    %1076 = vmatprep.subr.mxu0 0.0
    %1077 = vmatpush2.msra.mxu0 0.0
    %1078 = vmatprep.subr.mxu0 0.0
    %1079 = vmatpush2.msra.mxu0 0.0
    %1080 = vmatprep.subr.mxu0 0.0
    %1081 = vmatpush2.msra.mxu0 0.0
    %1082 = vmatprep.subr.mxu0 0.0
    %1083 = vmatpush2.msra.mxu0 0.0
    %1084 = vmatprep.subr.mxu0 0.0
    %1085 = vmatpush2.msra.mxu0 0.0
    %1086 = vmatprep.subr.mxu0 0.0
    %1087 = vmatpush2.msra.mxu0 0.0
    %1088 = vmatprep.subr.mxu0 0.0
    %1089 = vmatpush2.msra.mxu0 0.0
    %1090 = vmatprep.subr.mxu0 0.0
    %1091 = vmatpush2.msra.mxu0 0.0
    %1092 = vmatprep.subr.mxu0 0.0
    %1093 = vmatpush2.msra.mxu0 0.0
    %1094 = vmatprep.subr.mxu0 0.0
    %1095 = vmatpush2.msra.mxu0 0.0
    %1096 = vmatprep.subr.mxu0 0.0
    %1097 = vmatpush2.msra.mxu0 0.0
    %1098 = vmatprep.mubr.f32.mxu0 0.0
    %1099 = vmatmul.mubr.f32.gmra.mxu0 %v1032
    %v1100 = vpop.f32.mrf.mxu0
    %v1101 = vadd.f32 %v1001, %v1100
    %v1102 = vpop.f32.mrf.mxu0
    %1103 = vdwg.mxu0
    %1104 = vst [vmem:[#allocation15] sm:$0x3] %v1101
    %1105 = vst.msk [vmem:[#allocation15 + $0x2] sm:$0x3] %vm1025, %v1024
    %v1106 = vcombine.high %v640, %v640
    %v1108 = vunpack.c.l.s4 1983009808
    %v1109 = vunpack.c.0.s8 %v1108
    %v1110 = vlaneseq
    %v1111 = vshrl.u32 %v1110, 7
    %v1112 = vsub.s32 %v1109, %v1111
    %v1113 = vrot.slane %v640, %v1112
    %v1115 = vunpack.c.l.s4 1983009808
    %v1116 = vunpack.c.0.s8 %v1115
    %v1117 = vlaneseq
    %v1118 = vshrl.u32 %v1117, 7
    %v1119 = vsub.s32 %v1116, %v1118
    %v1120 = vrot.slane %v1106, %v1119
    %v1121 = vcombine.high %v1113, %v1113
    %v1122 = vcombine.high %v1120, %v1120
    %v1123 = vcombine.high %v641, %v641
    %v1125 = vunpack.c.l.s4 1983009808
    %v1126 = vunpack.c.0.s8 %v1125
    %v1127 = vlaneseq
    %v1128 = vshrl.u32 %v1127, 7
    %v1129 = vsub.s32 %v1126, %v1128
    %v1130 = vrot.slane %v641, %v1129
    %v1132 = vunpack.c.l.s4 1983009808
    %v1133 = vunpack.c.0.s8 %v1132
    %v1134 = vlaneseq
    %v1135 = vshrl.u32 %v1134, 7
    %v1136 = vsub.s32 %v1133, %v1135
    %v1137 = vrot.slane %v1123, %v1136
    %v1138 = vcombine.high %v1130, %v1130
    %v1139 = vcombine.high %v1137, %v1137
    %v1140 = vcombine.low %v1113, %v1121
    %v1141 = vcombine.low %v1120, %v1122
    %v1143 = vunpack.c.l.s4 1983009808
    %v1144 = vunpack.c.0.s8 %v1143
    %v1145 = vlaneseq
    %v1146 = vshrl.u32 %v1145, 7
    %v1147 = vsub.s32 %v1144, %v1146
    %v1148 = vrot.slane %v1140, %v1147
    %v1150 = vunpack.c.l.s4 1983009808
    %v1151 = vunpack.c.0.s8 %v1150
    %v1152 = vlaneseq
    %v1153 = vshrl.u32 %v1152, 7
    %v1154 = vsub.s32 %v1151, %v1153
    %v1155 = vrot.slane %v1141, %v1154
    %v1156 = vcombine.low %v1148, %v1155
    %v1157 = vcombine.low %v1130, %v1138
    %v1158 = vcombine.low %v1137, %v1139
    %v1160 = vunpack.c.l.s4 1983009808
    %v1161 = vunpack.c.0.s8 %v1160
    %v1162 = vlaneseq
    %v1163 = vshrl.u32 %v1162, 7
    %v1164 = vsub.s32 %v1161, %v1163
    %v1165 = vrot.slane %v1157, %v1164
    %v1167 = vunpack.c.l.s4 1983009808
    %v1168 = vunpack.c.0.s8 %v1167
    %v1169 = vlaneseq
    %v1170 = vshrl.u32 %v1169, 7
    %v1171 = vsub.s32 %v1168, %v1170
    %v1172 = vrot.slane %v1158, %v1171
    %v1173 = vcombine.low %v1165, %v1172
    %1174 = vset.pattern.permute.xlu0 0
    %1175 = vperm.xlu0 %1174, %v1156
    %v1176 = vpop.permute.xlu0 %1175
    %1177 = vset.pattern.permute.xlu0 0
    %1178 = vperm.xlu0 %1177, %v1173
    %v1179 = vpop.permute.xlu0 %1178
    %v1180 = vlaneseq
    %v1181 = vshrl.u32 %v1180, 7
    %v1182 = vsub.s32 %v574, %v1181
    %v1183 = vrot.slane %v1176, %v1182
    %v1184 = vlaneseq
    %v1185 = vshrl.u32 %v1184, 7
    %v1186 = vsub.s32 %v574, %v1185
    %v1187 = vrot.slane %v1179, %v1186
    %v1188 = vsel %vm583, %v1187, %v1183
    %v1190 = vunpack.c.l.s4 1983009808
    %v1191 = vunpack.c.0.s8 %v1190
    %v1192 = vlaneseq
    %v1193 = vshrl.u32 %v1192, 7
    %v1194 = vsub.s32 %v1191, %v1193
    %v1195 = vrot.slane %v1188, %v1194
    %1197 = vst.msk [vmem:[#allocation15 + $0x4] sm:$0x3] %vm586, %v1195
    // Predicated region
    $region62: #{decode_fused.1} parent=1 // pred_check
      _
    $region63: #{decode_fused.1} parent=1 // pred_check_branch
      %1199 = sbr.rel (0) target = $region65
    $region64: #{decode_fused.1} parent=1 // pred_region
      %s1201 = ssub.s32 96, 96
      %1202 = vsyncadd [#allocation6], %s1201
      %s1204 = sshll.u32 [#allocation15], 4
      %s1205 = int_to_ptr.vmem [resolvable:$true] %s1204
      %1207 = dma.vmem_to_hbm [thread:$0]  %s1205, 96, %s8, [#allocation6]
    $region65: #{decode_fused.1} parent=1 // pred_fallthru
      _
    // Predicated region
    $region66: #{decode_fused.1} parent=1 // pred_check
      _
    $region67: #{decode_fused.1} parent=1 // pred_check_branch
      %1209 = sbr.rel (0) target = $region69
    $region68: #{decode_fused.1} parent=1 // pred_region
      %1210 = dma.done [#allocation6], 96
    $region69: #{decode_fused.1} parent=1 // pred_fallthru
      _
    %1211 = vsyncpa [#allocation5], 1
    %1212 = vsyncpa [#allocation8], 1
    %1213 = vsyncpa [#allocation11], 1
    %1214 = vsyncpa [#allocation14], 1
    %1215 = vsyncpa [#allocation6], 1

</llo_original>
